<compile_context>
chip_gen: v5e
topology: v5e:2x2
jax: 0.10.0
libtpu: 0.0.40
codegen_flags: <defaults>
</compile_context>

<pallas_src>
import functools

import jax
import jax.numpy as jnp
from jax import lax
from jax.experimental import pallas as pl
from jax.experimental.pallas import tpu as pltpu


def _convlstm_kernel(pt_ref, wt_ref, b_ref, c_ref, h_out_ref, c_out_ref, *, HID):
    """One (batch, spatial-tile) block per grid step.

    pt_ref : (1, KH*KW*C, TN)  bf16  im2col patches, channel-first
    wt_ref : (4*HID, KH*KW*C)  bf16  repacked conv weights
    b_ref  : (4*HID, 1)        f32   conv bias
    c_ref  : (1, HID, TN)      f32   previous cell state (flattened spatial)
    h_out_ref, c_out_ref : (1, HID, TN)
    """
    # Single fat MXU matmul: (4H, K*C) @ (K*C, TN) -> (4H, TN), f32 accumulate.
    gates = jnp.dot(wt_ref[...], pt_ref[0],
                    preferred_element_type=jnp.float32)
    gates = gates + b_ref[...]                       # broadcast bias over lanes

    # PyTorch chunk order along the gate (sublane) dim: i, f, o, g.
    i = jax.nn.sigmoid(gates[0 * HID:1 * HID, :])
    f = jax.nn.sigmoid(gates[1 * HID:2 * HID, :])
    o = jax.nn.sigmoid(gates[2 * HID:3 * HID, :])
    g = jnp.tanh(gates[3 * HID:4 * HID, :])

    c_prev = c_ref[0]                                # (HID, TN) f32
    c_next = f * c_prev + i * g
    h_next = o * jnp.tanh(c_next)

    h_out_ref[0] = h_next.astype(h_out_ref.dtype)
    c_out_ref[0] = c_next.astype(c_out_ref.dtype)


def conv_lstm_cell(x_nchw, h_prev_nchw, c_prev_nchw, weight_hwio, bias, *,
                   kernel_size=(3, 3), padding=None,
                   compute_dtype=jnp.bfloat16):
    """ConvLSTMCell.forward. Inputs/outputs are NCHW, matching PyTorch."""
    KH, KW = kernel_size
    if padding is None:
        padding = (KH // 2, KW // 2)
    ph, pw = padding

    B, Cin, H, W = x_nchw.shape
    HID = h_prev_nchw.shape[1]
    C = Cin + HID
    G = 4 * HID
    KC = KH * KW * C
    assert weight_hwio.shape == (KH, KW, C, G)
    assert 2 * ph == KH - 1 and 2 * pw == KW - 1, "only 'same' conv supported"

    SP = H * W
    # Spatial tile = lane dim of the matmul. 128 gives pipeline depth at small
    # shapes; for very large images this could be raised (any multiple of 128).
    TN = 128 if SP % 128 == 0 else SP

    # --- wrapper glue: all in NCHW, only cheap pads/reshapes/concats ---
    combined = jnp.concatenate([x_nchw, h_prev_nchw], axis=1)       # (B,C,H,W)
    combined = combined.astype(compute_dtype)
    combined_p = jnp.pad(combined, ((0, 0), (0, 0), (ph, ph), (pw, pw)))
    # im2col, channel-first; channel order (kh, kw, c) matches weight repack.
    patches = jnp.concatenate(
        [combined_p[:, :, kh:kh + H, kw:kw + W]
         for kh in range(KH) for kw in range(KW)], axis=1)          # (B,KC,H,W)
    patches = patches.reshape(B, KC, SP)

    # HWIO (KH,KW,C,G) -> (G, KH*KW*C), matching the patches' channel order.
    wt = jnp.transpose(weight_hwio, (3, 0, 1, 2)).reshape(G, KC)
    wt = wt.astype(compute_dtype)
    bias2d = bias.reshape(G, 1).astype(jnp.float32)
    c_prev = c_prev_nchw.reshape(B, HID, SP).astype(jnp.float32)

    kernel = functools.partial(_convlstm_kernel, HID=HID)
    out_dtype = x_nchw.dtype

    h_next, c_next = pl.pallas_call(
        kernel,
        out_shape=(jax.ShapeDtypeStruct((B, HID, SP), out_dtype),
                   jax.ShapeDtypeStruct((B, HID, SP), out_dtype)),
        grid_spec=pltpu.PrefetchScalarGridSpec(
            num_scalar_prefetch=0,
            grid=(B, SP // TN),
            in_specs=[
                pl.BlockSpec((1, KC, TN), lambda b, s: (b, 0, s)),
                pl.BlockSpec((G, KC), lambda b, s: (0, 0)),
                pl.BlockSpec((G, 1), lambda b, s: (0, 0)),
                pl.BlockSpec((1, HID, TN), lambda b, s: (b, 0, s)),
            ],
            out_specs=[
                pl.BlockSpec((1, HID, TN), lambda b, s: (b, 0, s)),
                pl.BlockSpec((1, HID, TN), lambda b, s: (b, 0, s)),
            ],
        ),
        compiler_params=pltpu.CompilerParams(
            dimension_semantics=("parallel", "parallel")),
    )(patches, wt, bias2d, c_prev)

    # Outputs are already channel-first; only free reshapes back to NCHW.
    return (h_next.reshape(B, HID, H, W), c_next.reshape(B, HID, H, W))


def _reference_conv_lstm_cell(x_nchw, h_prev_nchw, c_prev_nchw, weight_hwio,
                              bias, kernel_size, padding):
    """Pure-JAX reference mirroring the PyTorch module (NCHW semantics)."""
    KH, KW = kernel_size
    ph, pw = padding
    combined = jnp.concatenate([x_nchw, h_prev_nchw], axis=1)       # (B,C,H,W)
    w_oihw = jnp.transpose(weight_hwio, (3, 2, 0, 1))
    gates = lax.conv_general_dilated(
        combined, w_oihw, window_strides=(1, 1),
        padding=((ph, ph), (pw, pw)),
        dimension_numbers=("NCHW", "OIHW", "NCHW"),
        precision=lax.Precision.HIGHEST)
    gates = gates + bias.reshape(1, -1, 1, 1)
    HID = h_prev_nchw.shape[1]
    i = jax.nn.sigmoid(gates[:, 0 * HID:1 * HID])
    f = jax.nn.sigmoid(gates[:, 1 * HID:2 * HID])
    o = jax.nn.sigmoid(gates[:, 2 * HID:3 * HID])
    g = jnp.tanh(gates[:, 3 * HID:4 * HID])
    c_next = f * c_prev_nchw + i * g
    h_next = o * jnp.tanh(c_next)
    return h_next, c_next


if __name__ == "__main__":
    # Small shapes consistent with the module's forward.
    B, IN_DIM, HID, H, W = 2, 4, 32, 16, 16
    KH, KW = 3, 3
    PAD = (KH // 2, KW // 2)
    C = IN_DIM + HID
    G = 4 * HID

    key = jax.random.PRNGKey(0)
    kx, kh, kc, kw_, kb = jax.random.split(key, 5)

    x = jax.random.normal(kx, (B, IN_DIM, H, W), dtype=jnp.float32)
    h_prev = jax.random.normal(kh, (B, HID, H, W), dtype=jnp.float32) * 0.1
    c_prev = jax.random.normal(kc, (B, HID, H, W), dtype=jnp.float32) * 0.1

    # Deterministic parameter init (Conv2d(C -> 4*HID, 3x3, bias=True)).
    fan_in = C * KH * KW
    weight_hwio = (jax.random.normal(kw_, (KH, KW, C, G), dtype=jnp.float32)
                   / jnp.sqrt(fan_in))
    bias = jax.random.normal(kb, (G,), dtype=jnp.float32) * 0.01

    h_next, c_next = conv_lstm_cell(x, h_prev, c_prev, weight_hwio, bias,
                                    kernel_size=(KH, KW), padding=PAD)
    jax.block_until_ready((h_next, c_next))
    assert h_next.shape == (B, HID, H, W) and c_next.shape == (B, HID, H, W)

    # Tight check vs. a reference fed the same bf16-rounded MXU inputs
    # (isolates kernel semantics from the bf16 cast).
    to_bf = lambda a: a.astype(jnp.bfloat16).astype(jnp.float32)
    h_ref, c_ref = _reference_conv_lstm_cell(
        to_bf(x), to_bf(h_prev), c_prev, to_bf(weight_hwio), bias,
        (KH, KW), PAD)
    assert jnp.allclose(h_next, h_ref, atol=1e-4, rtol=1e-4)
    assert jnp.allclose(c_next, c_ref, atol=1e-4, rtol=1e-4)

    # Loose sanity check vs. the full-f32 reference (bf16 matmul inputs only).
    h_f32, c_f32 = _reference_conv_lstm_cell(x, h_prev, c_prev, weight_hwio,
                                             bias, (KH, KW), PAD)
    assert jnp.max(jnp.abs(h_next - h_f32)) < 5e-2
    assert jnp.max(jnp.abs(c_next - c_f32)) < 5e-2

    print("KERNEL_OK")
</pallas_src>

<mosaic_0001>
module attributes {stable_mosaic.version = 11 : i64} {
  func.func @_convlstm_kernel(%arg0: i32, %arg1: i32, %arg2: memref<1x324x128xbf16, #tpu.memory_space<vmem>>, %arg3: memref<128x324xbf16, #tpu.memory_space<vmem>>, %arg4: memref<128x1xf32, #tpu.memory_space<vmem>>, %arg5: memref<1x32x128xf32, #tpu.memory_space<vmem>>, %arg6: memref<1x32x128xf32, #tpu.memory_space<vmem>>, %arg7: memref<1x32x128xf32, #tpu.memory_space<vmem>>) attributes {dimension_semantics = [#tpu.dimension_semantics<parallel>, #tpu.dimension_semantics<parallel>], iteration_bounds = array<i64: 2, 2>, scalar_prefetch = 0 : i64, scratch_operands = 0 : i64, tpu.core_type = #tpu.core_type<tc>, window_params = [{transform_indices = @transform_0, window_bounds = array<i64: 1, 324, 128>}, {pipeline_mode = #tpu.pipeline_mode<synchronous>, transform_indices = @transform_1, window_bounds = array<i64: 128, 324>}, {pipeline_mode = #tpu.pipeline_mode<synchronous>, transform_indices = @transform_2, window_bounds = array<i64: 128, 1>}, {transform_indices = @transform_3, window_bounds = array<i64: 1, 32, 128>}, {transform_indices = @transform_4, window_bounds = array<i64: 1, 32, 128>}, {transform_indices = @transform_5, window_bounds = array<i64: 1, 32, 128>}]} {
    %c0 = arith.constant 0 : index
    %c0_0 = arith.constant 0 : index
    %0 = vector.load %arg3[%c0, %c0_0] : memref<128x324xbf16, #tpu.memory_space<vmem>>, vector<128x324xbf16>
    %c0_1 = arith.constant 0 : index
    %c0_2 = arith.constant 0 : index
    %c0_3 = arith.constant 0 : index
    %1 = vector.load %arg2[%c0_1, %c0_2, %c0_3] : memref<1x324x128xbf16, #tpu.memory_space<vmem>>, vector<1x324x128xbf16>
    %2 = vector.shape_cast %1 : vector<1x324x128xbf16> to vector<324x128xbf16>
    %cst = arith.constant dense<0.000000e+00> : vector<128x128xf32>
    %3 = tpu.matmul %0, %2, %cst {dimension_numbers = #tpu.dot_dimension_numbers<[1], [0], [0], [1], [0, 0, 1, 1], [], []>} : vector<128x324xbf16>, vector<324x128xbf16>, vector<128x128xf32> -> vector<128x128xf32>
    %c0_4 = arith.constant 0 : index
    %c0_5 = arith.constant 0 : index
    %4 = vector.load %arg4[%c0_4, %c0_5] : memref<128x1xf32, #tpu.memory_space<vmem>>, vector<128x1xf32>
    %5 = vector.broadcast %4 : vector<128x1xf32> to vector<128x128xf32>
    %6 = arith.addf %3, %5 : vector<128x128xf32>
    %7 = vector.extract_strided_slice %6 {offsets = [0, 0], sizes = [32, 128], strides = [1, 1]} : vector<128x128xf32> to vector<32x128xf32>
    %8 = arith.negf %7 : vector<32x128xf32>
    %9 = math.exp %8 : vector<32x128xf32>
    %cst_6 = arith.constant 1.000000e+00 : f32
    %10 = vector.broadcast %cst_6 : f32 to vector<32x128xf32>
    %11 = arith.addf %10, %9 : vector<32x128xf32>
    %12 = arith.divf %10, %11 : vector<32x128xf32>
    %13 = vector.extract_strided_slice %6 {offsets = [32, 0], sizes = [32, 128], strides = [1, 1]} : vector<128x128xf32> to vector<32x128xf32>
    %14 = arith.negf %13 : vector<32x128xf32>
    %15 = math.exp %14 : vector<32x128xf32>
    %cst_7 = arith.constant 1.000000e+00 : f32
    %16 = vector.broadcast %cst_7 : f32 to vector<32x128xf32>
    %17 = arith.addf %16, %15 : vector<32x128xf32>
    %18 = arith.divf %16, %17 : vector<32x128xf32>
    %19 = vector.extract_strided_slice %6 {offsets = [64, 0], sizes = [32, 128], strides = [1, 1]} : vector<128x128xf32> to vector<32x128xf32>
    %20 = arith.negf %19 : vector<32x128xf32>
    %21 = math.exp %20 : vector<32x128xf32>
    %cst_8 = arith.constant 1.000000e+00 : f32
    %22 = vector.broadcast %cst_8 : f32 to vector<32x128xf32>
    %23 = arith.addf %22, %21 : vector<32x128xf32>
    %24 = arith.divf %22, %23 : vector<32x128xf32>
    %25 = vector.extract_strided_slice %6 {offsets = [96, 0], sizes = [32, 128], strides = [1, 1]} : vector<128x128xf32> to vector<32x128xf32>
    %26 = math.tanh %25 : vector<32x128xf32>
    %c0_9 = arith.constant 0 : index
    %c0_10 = arith.constant 0 : index
    %c0_11 = arith.constant 0 : index
    %27 = vector.load %arg5[%c0_9, %c0_10, %c0_11] : memref<1x32x128xf32, #tpu.memory_space<vmem>>, vector<1x32x128xf32>
    %28 = vector.shape_cast %27 : vector<1x32x128xf32> to vector<32x128xf32>
    %29 = arith.mulf %18, %28 : vector<32x128xf32>
    %30 = arith.mulf %12, %26 : vector<32x128xf32>
    %31 = arith.addf %29, %30 : vector<32x128xf32>
    %32 = math.tanh %31 : vector<32x128xf32>
    %33 = arith.mulf %24, %32 : vector<32x128xf32>
    %c0_12 = arith.constant 0 : index
    %c0_13 = arith.constant 0 : index
    %c0_14 = arith.constant 0 : index
    %34 = vector.load %arg6[%c0_12, %c0_13, %c0_14] : memref<1x32x128xf32, #tpu.memory_space<vmem>>, vector<1x32x128xf32>
    %35 = vector.shape_cast %34 : vector<1x32x128xf32> to vector<32x128xf32>
    %36 = vector.shape_cast %33 : vector<32x128xf32> to vector<1x32x128xf32>
    tpu.vector_store %arg6[%c0_12, %c0_13, %c0_14], %36 {strides = array<i32>} : memref<1x32x128xf32, #tpu.memory_space<vmem>>, vector<1x32x128xf32>,
    %c0_15 = arith.constant 0 : index
    %c0_16 = arith.constant 0 : index
    %c0_17 = arith.constant 0 : index
    %37 = vector.load %arg7[%c0_15, %c0_16, %c0_17] : memref<1x32x128xf32, #tpu.memory_space<vmem>>, vector<1x32x128xf32>
    %38 = vector.shape_cast %37 : vector<1x32x128xf32> to vector<32x128xf32>
    %39 = vector.shape_cast %31 : vector<32x128xf32> to vector<1x32x128xf32>
    tpu.vector_store %arg7[%c0_15, %c0_16, %c0_17], %39 {strides = array<i32>} : memref<1x32x128xf32, #tpu.memory_space<vmem>>, vector<1x32x128xf32>,
    return
  }
  func.func @transform_0(%arg0: i32, %arg1: i32) -> (i32, i32, i32) {
    %c0_i32 = arith.constant 0 : i32
    %c0_i32_0 = arith.constant 0 : i32
    return %arg0, %c0_i32, %arg1 : i32, i32, i32
  }
  func.func @transform_1(%arg0: i32, %arg1: i32) -> (i32, i32) {
    %c0_i32 = arith.constant 0 : i32
    %c0_i32_0 = arith.constant 0 : i32
    %c0_i32_1 = arith.constant 0 : i32
    return %c0_i32, %c0_i32_0 : i32, i32
  }
  func.func @transform_2(%arg0: i32, %arg1: i32) -> (i32, i32) {
    %c0_i32 = arith.constant 0 : i32
    %c0_i32_0 = arith.constant 0 : i32
    %c0_i32_1 = arith.constant 0 : i32
    return %c0_i32, %c0_i32_0 : i32, i32
  }
  func.func @transform_3(%arg0: i32, %arg1: i32) -> (i32, i32, i32) {
    %c0_i32 = arith.constant 0 : i32
    %c0_i32_0 = arith.constant 0 : i32
    return %arg0, %c0_i32, %arg1 : i32, i32, i32
  }
  func.func @transform_4(%arg0: i32, %arg1: i32) -> (i32, i32, i32) {
    %c0_i32 = arith.constant 0 : i32
    %c0_i32_0 = arith.constant 0 : i32
    return %arg0, %c0_i32, %arg1 : i32, i32, i32
  }
  func.func @transform_5(%arg0: i32, %arg1: i32) -> (i32, i32, i32) {
    %c0_i32 = arith.constant 0 : i32
    %c0_i32_0 = arith.constant 0 : i32
    return %arg0, %c0_i32, %arg1 : i32, i32, i32
  }
}

</mosaic_0001>

<llo_original>
// kernel: tpu_custom_call.1
$region0: #{tpu_custom_call.1}
  #allocation0 [shape = 'u32[]', space=smem, size = 0x4, offset = 0x4, fixed_abs, tag = 'smem constant byte address 0x4 - core index']
  #allocation1 [shape = 'u32[72,128]{1,0:T(1,128)}', space=vmem, size = 0x9000, scoped, tag = 'internal scratch']
  %s0 = inlined_call_operand.vmem [shape: bf16[2,324,256], index: 0, kind: input, shape index: {}]
  %s1 = inlined_call_operand.vmem [shape: bf16[128,324], index: 1, kind: input, shape index: {}]
  %s2 = inlined_call_operand.vmem [shape: f32[128,1], index: 2, kind: input, shape index: {}]
  %s3 = inlined_call_operand.vmem [shape: f32[2,32,256], index: 3, kind: input, shape index: {}]
  %s4 = inlined_call_operand.hbm [shape: f32[2,32,256], index: 4, kind: output, shape index: {0}]
  %s5 = inlined_call_operand.hbm [shape: f32[2,32,256], index: 5, kind: output, shape index: {1}]
  %6 = xla_tuple %s4, %s5
  %s7 = sld [smem:[#allocation0]]
  $region136: #{tpu_custom_call.1} parent=0
    _
  %s9 = ssub.s32 1, %s7
  %s10 = scalar_select 0, %s9, %s7
  $region1: #{tpu_custom_call.1} parent=0
    #allocation2 [shape = 'u8[167936]{0}', space=vmem, size = 0x29000, scoped, tag = 'input window, operand 0']
    #allocation3 [shape = 'u8[32768]{0}', space=vmem, size = 0x8000, scoped, tag = 'input window, operand 3']
    #allocation4 [shape = 'u8[32768]{0}', space=vmem, size = 0x8000, scoped, tag = 'output window, operand 0']
    #allocation5 [shape = 's32[2]{0}', space=sflag, size = 0x8, scoped, tag = 'scoped memory for tpu_custom_call.1']
    #allocation6 [shape = 'u8[32768]{0}', space=vmem, size = 0x8000, scoped, tag = 'output window, operand 1']
    #allocation7 [shape = 's32[2]{0}', space=sflag, size = 0x8, scoped, tag = 'scoped memory for tpu_custom_call.1']
    %11 = vsyncpa [#allocation5], 0
    %s12 = scalar_lea.sflag [#allocation5], 1
    %13 = vsyncpa %s12, 0
    %14 = vsyncpa [#allocation7], 0
    %s15 = scalar_lea.sflag [#allocation7], 1
    %16 = vsyncpa %s15, 0
    loop: start=0, step=1, limit=6
    $region2: #{tpu_custom_call.1} parent=1 // loop_pre_header
      _
    $region3: #{tpu_custom_call.1} parent=1 // loop_header
      %s18 = sphi 0, %s22
      %p19 = scmp.ge.s32.totalorder %s18, 6
      %s25 = sphi 0, %s37
      %s26 = sphi 0, %s33
      %s27 = sphi 0, %s25
      %s28 = sphi 0, %s26
      %s29 = sphi 0, %s27
      %s30 = sphi 0, %s28
      %s42 = sphi 0, %s44
      %s45 = sphi 0, %s42
      %s46 = sphi 0, %s45
      %s62 = sphi 0, %s46
      %s66 = sphi 0, %s66
      %s68 = sphi 0, %s66
      %s69 = sphi 0, %s68
      %s83 = sphi 0, %s69
      %s87 = sphi 0, %s87
      %s89 = sphi 0, %s87
      %s90 = sphi 0, %s89
      %s104 = sphi 0, %s90
      %s112 = sphi 0, %s114
      %s115 = sphi 0, %s112
      %s116 = sphi 0, %s115
      %s132 = sphi 0, %s116
      %s140 = sphi 0, %s142
      %s143 = sphi 0, %s140
      %s144 = sphi 0, %s143
      %s160 = sphi 0, %s144
      %s168 = sphi 0, %s170
      %s171 = sphi 0, %s168
      %s172 = sphi 0, %s171
      %s188 = sphi 0, %s172
    $region4: #{tpu_custom_call.1} parent=1 // loop_header_branch
      %21 = sbr.rel (%p19) target = $region8
    $region5: #{tpu_custom_call.1} parent=1 // loop_body
      %s23 = ssub.s32 %s18, 1
      %s24 = ssub.s32 %s18, 2
      %s31 = sadd.s32 1, %s26
      %p32 = scmp.ge.s32.totalorder %s31, 2
      %s33 = scalar_select %p32, 0, %s31
      %s34 = sadd.s32 1, %s25
      %s35 = scalar_select %p32, %s34, %s25
      %p36 = scmp.ge.s32.totalorder %s35, 2
      %s37 = scalar_select %p36, 0, %s35
      %s38 = ssub.s32 %s25, %s37
      %s39 = ssub.s32 %s26, %s33
      %s40 = sor.u32 %s38, %s39
      %p41 = scmp.eq.s32.totalorder %s40, 0
      %s43 = sadd.s32 %s42, 1
      %s44 = scalar_select %p41, %s42, %s43
      %p47 = pneg %p41
      %p48 = scmp.eq.s32.totalorder %s18, 3
      %p49 = por %p47, %p48
      %p50 = scmp.ne.s32.totalorder %s42, %s45
      %p51 = scmp.eq.s32.totalorder %s18, 0
      %p52 = por %p50, %p51
      %p53 = scmp.ne.s32.totalorder %s42, %s45
      %p54 = scmp.eq.s32.totalorder %s23, 3
      %p55 = por %p53, %p54
      %p56 = scmp.ne.s32.totalorder %s45, %s46
      %p57 = scmp.eq.s32.totalorder %s23, 0
      %p58 = por %p56, %p57
      %p59 = scmp.ne.s32.totalorder %s45, %s46
      %p60 = scmp.eq.s32.totalorder %s24, 3
      %p61 = por %p59, %p60
      %p63 = scmp.ne.s32.totalorder %s46, %s62
      %p64 = scmp.eq.s32.totalorder %s24, 0
      %p65 = por %p63, %p64
      %s67 = sadd.s32 %s66, 1
      %p70 = scmp.eq.s32.totalorder %s18, 3
      %p71 = scmp.ne.s32.totalorder %s66, %s68
      %p72 = scmp.eq.s32.totalorder %s18, 0
      %p73 = por %p71, %p72
      %p74 = scmp.ne.s32.totalorder %s66, %s68
      %p75 = scmp.eq.s32.totalorder %s23, 3
      %p76 = por %p74, %p75
      %p77 = scmp.ne.s32.totalorder %s68, %s69
      %p78 = scmp.eq.s32.totalorder %s23, 0
      %p79 = por %p77, %p78
      %p80 = scmp.ne.s32.totalorder %s68, %s69
      %p81 = scmp.eq.s32.totalorder %s24, 3
      %p82 = por %p80, %p81
      %p84 = scmp.ne.s32.totalorder %s69, %s83
      %p85 = scmp.eq.s32.totalorder %s24, 0
      %p86 = por %p84, %p85
      %s88 = sadd.s32 %s87, 1
      %p91 = scmp.eq.s32.totalorder %s18, 3
      %p92 = scmp.ne.s32.totalorder %s87, %s89
      %p93 = scmp.eq.s32.totalorder %s18, 0
      %p94 = por %p92, %p93
      %p95 = scmp.ne.s32.totalorder %s87, %s89
      %p96 = scmp.eq.s32.totalorder %s23, 3
      %p97 = por %p95, %p96
      %p98 = scmp.ne.s32.totalorder %s89, %s90
      %p99 = scmp.eq.s32.totalorder %s23, 0
      %p100 = por %p98, %p99
      %p101 = scmp.ne.s32.totalorder %s89, %s90
      %p102 = scmp.eq.s32.totalorder %s24, 3
      %p103 = por %p101, %p102
      %p105 = scmp.ne.s32.totalorder %s90, %s104
      %p106 = scmp.eq.s32.totalorder %s24, 0
      %p107 = por %p105, %p106
      %s108 = ssub.s32 %s25, %s37
      %s109 = ssub.s32 %s26, %s33
      %s110 = sor.u32 %s108, %s109
      %p111 = scmp.eq.s32.totalorder %s110, 0
      %s113 = sadd.s32 %s112, 1
      %s114 = scalar_select %p111, %s112, %s113
      %p117 = pneg %p111
      %p118 = scmp.eq.s32.totalorder %s18, 3
      %p119 = por %p117, %p118
      %p120 = scmp.ne.s32.totalorder %s112, %s115
      %p121 = scmp.eq.s32.totalorder %s18, 0
      %p122 = por %p120, %p121
      %p123 = scmp.ne.s32.totalorder %s112, %s115
      %p124 = scmp.eq.s32.totalorder %s23, 3
      %p125 = por %p123, %p124
      %p126 = scmp.ne.s32.totalorder %s115, %s116
      %p127 = scmp.eq.s32.totalorder %s23, 0
      %p128 = por %p126, %p127
      %p129 = scmp.ne.s32.totalorder %s115, %s116
      %p130 = scmp.eq.s32.totalorder %s24, 3
      %p131 = por %p129, %p130
      %p133 = scmp.ne.s32.totalorder %s116, %s132
      %p134 = scmp.eq.s32.totalorder %s24, 0
      %p135 = por %p133, %p134
      %s136 = ssub.s32 %s25, %s37
      %s137 = ssub.s32 %s26, %s33
      %s138 = sor.u32 %s136, %s137
      %p139 = scmp.eq.s32.totalorder %s138, 0
      %s141 = sadd.s32 %s140, 1
      %s142 = scalar_select %p139, %s140, %s141
      %p145 = pneg %p139
      %p146 = scmp.eq.s32.totalorder %s18, 3
      %p147 = por %p145, %p146
      %p148 = scmp.ne.s32.totalorder %s140, %s143
      %p149 = scmp.eq.s32.totalorder %s18, 0
      %p150 = por %p148, %p149
      %p151 = scmp.ne.s32.totalorder %s140, %s143
      %p152 = scmp.eq.s32.totalorder %s23, 3
      %p153 = por %p151, %p152
      %p154 = scmp.ne.s32.totalorder %s143, %s144
      %p155 = scmp.eq.s32.totalorder %s23, 0
      %p156 = por %p154, %p155
      %p157 = scmp.ne.s32.totalorder %s143, %s144
      %p158 = scmp.eq.s32.totalorder %s24, 3
      %p159 = por %p157, %p158
      %p161 = scmp.ne.s32.totalorder %s144, %s160
      %p162 = scmp.eq.s32.totalorder %s24, 0
      %p163 = por %p161, %p162
      %s164 = ssub.s32 %s25, %s37
      %s165 = ssub.s32 %s26, %s33
      %s166 = sor.u32 %s164, %s165
      %p167 = scmp.eq.s32.totalorder %s166, 0
      %s169 = sadd.s32 %s168, 1
      %s170 = scalar_select %p167, %s168, %s169
      %p173 = pneg %p167
      %p174 = scmp.eq.s32.totalorder %s18, 3
      %p175 = por %p173, %p174
      %p176 = scmp.ne.s32.totalorder %s168, %s171
      %p177 = scmp.eq.s32.totalorder %s18, 0
      %p178 = por %p176, %p177
      %p179 = scmp.ne.s32.totalorder %s168, %s171
      %p180 = scmp.eq.s32.totalorder %s23, 3
      %p181 = por %p179, %p180
      %p182 = scmp.ne.s32.totalorder %s171, %s172
      %p183 = scmp.eq.s32.totalorder %s23, 0
      %p184 = por %p182, %p183
      %p185 = scmp.ne.s32.totalorder %s171, %s172
      %p186 = scmp.eq.s32.totalorder %s24, 3
      %p187 = por %p185, %p186
      %p189 = scmp.ne.s32.totalorder %s172, %s188
      %p190 = scmp.eq.s32.totalorder %s24, 0
      %p191 = por %p189, %p190
      %p192 = scmp.le.s32.totalorder 1, %s18
      %p193 = scmp.lt.s32.totalorder %s18, 5
      %p194 = pnand %p192, %p193
      %p195 = pneg %p194
      // Predicated region
      $region9: #{tpu_custom_call.1} parent=5 // pred_check
        _
      $region10: #{tpu_custom_call.1} parent=5 // pred_check_branch
        %197 = sbr.rel (%p194) target = $region12
      $region11: #{tpu_custom_call.1} parent=5 // pred_region
        %s198 = ssub.s32 %s18, 1
        // Predicated region
        $region13: #{tpu_custom_call.1} parent=11 // pred_check
          %p199 = pneg %p79
        $region14: #{tpu_custom_call.1} parent=11 // pred_check_branch
          %201 = sbr.rel (%p199) target = $region16
        $region15: #{tpu_custom_call.1} parent=11 // pred_region
          _
        $region16: #{tpu_custom_call.1} parent=11 // pred_fallthru
          _
        // Predicated region
        $region17: #{tpu_custom_call.1} parent=11 // pred_check
          %p202 = pneg %p100
        $region18: #{tpu_custom_call.1} parent=11 // pred_check_branch
          %204 = sbr.rel (%p202) target = $region20
        $region19: #{tpu_custom_call.1} parent=11 // pred_region
          _
        $region20: #{tpu_custom_call.1} parent=11 // pred_fallthru
          _
      $region12: #{tpu_custom_call.1} parent=5 // pred_fallthru
        _
      %p205 = scmp.lt.s32.totalorder %s18, 4
      // Predicated region
      $region21: #{tpu_custom_call.1} parent=5 // pred_check
        %p206 = pneg %p205
      $region22: #{tpu_custom_call.1} parent=5 // pred_check_branch
        %208 = sbr.rel (%p206) target = $region24
      $region23: #{tpu_custom_call.1} parent=5 // pred_region
        // Predicated region
        $region25: #{tpu_custom_call.1} parent=23 // pred_check
          %p209 = pneg %p52
        $region26: #{tpu_custom_call.1} parent=23 // pred_check_branch
          %211 = sbr.rel (%p209) target = $region28
        $region27: #{tpu_custom_call.1} parent=23 // pred_region
          %s212 = sand.u32 %s42, 1
          %s213 = sand.u32 %s42, 1
          %s214 = smul.addr %s213, 164
          %s215 = scalar_lea.vmem [#allocation2], %s214
          %s216 = smul.addr %s25, 82
          %s217 = sadd.s32 %s26, %s216
          %s218 = smul.addr %s217, 4
          %s219 = scalar_lea.vmem %s0, %s218
          // Predicated region
          $region29: #{tpu_custom_call.1} parent=27 // pred_check
            _
          $region30: #{tpu_custom_call.1} parent=27 // pred_check_branch
            %221 = sbr.rel (0) target = $region32
          $region31: #{tpu_custom_call.1} parent=27 // pred_region
            // Predicated region
            $region33: #{tpu_custom_call.1} parent=31 // pred_check
              _
            $region34: #{tpu_custom_call.1} parent=31 // pred_check_branch
              %223 = sbr.rel target = $region36
            $region35: #{tpu_custom_call.1} parent=31 // pred_region
              // Predicated region
              $region48: #{tpu_custom_call.1} parent=35 // pred_check
                _
              $region49: #{tpu_custom_call.1} parent=35 // pred_check_branch
                %319 = sbr.rel (0) target = $region51
              $region50: #{tpu_custom_call.1} parent=35 // pred_region
                loop: start=0, step=1, limit=1
                $region52: #{tpu_custom_call.1} parent=50 // loop_pre_header
                  _
                $region53: #{tpu_custom_call.1} parent=50 // loop_header
                  %s321 = sphi 0, %s325
                  %p322 = scmp.ge.s32.totalorder %s321, 1
                  %s326 = sphi %s219, %s219
                  %s327 = sphi %s215, %s215
                $region54: #{tpu_custom_call.1} parent=50 // loop_header_branch
                  %324 = sbr.rel (%p322) target = $region58
                $region55: #{tpu_custom_call.1} parent=50 // loop_body
                  _
                $region56: #{tpu_custom_call.1} parent=50 // loop_footer
                  %s325 = sadd.s32 1, %s321
                $region57: #{tpu_custom_call.1} parent=50 // loop_footer_branch
                  %320 = sbr.rel target = $region53
                $region58: #{tpu_custom_call.1} parent=50 // loop_exit
                  _
                %s329 = ssub.s32 16, 1
                loop: start=0, step=1, limit=1
                $region59: #{tpu_custom_call.1} parent=50 // loop_pre_header
                  _
                $region60: #{tpu_custom_call.1} parent=50 // loop_header
                  %s331 = sphi 0, %s335
                  %p332 = scmp.ge.s32.totalorder %s331, 1
                  %s336 = sphi %s219, %s219
                  %s337 = sphi %s215, %s215
                $region61: #{tpu_custom_call.1} parent=50 // loop_header_branch
                  %334 = sbr.rel (%p332) target = $region65
                $region62: #{tpu_custom_call.1} parent=50 // loop_body
                  %v338 = vld [vmem:[%s336] sm:%s329]
                  %339 = vst [vmem:[%s337] sm:%s329] %v338
                  %v340 = vld [vmem:[%s336 + $0x8] sm:%s329]
                  %341 = vst [vmem:[%s337 + $0x4] sm:%s329] %v340
                  %v342 = vld [vmem:[%s336 + $0x10] sm:%s329]
                  %343 = vst [vmem:[%s337 + $0x8] sm:%s329] %v342
                  %v344 = vld [vmem:[%s336 + $0x18] sm:%s329]
                  %345 = vst [vmem:[%s337 + $0xc] sm:%s329] %v344
                  %v346 = vld [vmem:[%s336 + $0x20] sm:%s329]
                  %347 = vst [vmem:[%s337 + $0x10] sm:%s329] %v346
                  %v348 = vld [vmem:[%s336 + $0x28] sm:%s329]
                  %349 = vst [vmem:[%s337 + $0x14] sm:%s329] %v348
                  %v350 = vld [vmem:[%s336 + $0x30] sm:%s329]
                  %351 = vst [vmem:[%s337 + $0x18] sm:%s329] %v350
                  %v352 = vld [vmem:[%s336 + $0x38] sm:%s329]
                  %353 = vst [vmem:[%s337 + $0x1c] sm:%s329] %v352
                  %v354 = vld [vmem:[%s336 + $0x40] sm:%s329]
                  %355 = vst [vmem:[%s337 + $0x20] sm:%s329] %v354
                  %v356 = vld [vmem:[%s336 + $0x48] sm:%s329]
                  %357 = vst [vmem:[%s337 + $0x24] sm:%s329] %v356
                  %v358 = vld [vmem:[%s336 + $0x50] sm:%s329]
                  %359 = vst [vmem:[%s337 + $0x28] sm:%s329] %v358
                  %v360 = vld [vmem:[%s336 + $0x58] sm:%s329]
                  %361 = vst [vmem:[%s337 + $0x2c] sm:%s329] %v360
                  %v362 = vld [vmem:[%s336 + $0x60] sm:%s329]
                  %363 = vst [vmem:[%s337 + $0x30] sm:%s329] %v362
                  %v364 = vld [vmem:[%s336 + $0x68] sm:%s329]
                  %365 = vst [vmem:[%s337 + $0x34] sm:%s329] %v364
                  %v366 = vld [vmem:[%s336 + $0x70] sm:%s329]
                  %367 = vst [vmem:[%s337 + $0x38] sm:%s329] %v366
                  %v368 = vld [vmem:[%s336 + $0x78] sm:%s329]
                  %369 = vst [vmem:[%s337 + $0x3c] sm:%s329] %v368
                  %v370 = vld [vmem:[%s336 + $0x80] sm:%s329]
                  %371 = vst [vmem:[%s337 + $0x40] sm:%s329] %v370
                  %v372 = vld [vmem:[%s336 + $0x88] sm:%s329]
                  %373 = vst [vmem:[%s337 + $0x44] sm:%s329] %v372
                  %v374 = vld [vmem:[%s336 + $0x90] sm:%s329]
                  %375 = vst [vmem:[%s337 + $0x48] sm:%s329] %v374
                  %v376 = vld [vmem:[%s336 + $0x98] sm:%s329]
                  %377 = vst [vmem:[%s337 + $0x4c] sm:%s329] %v376
                  %v378 = vld [vmem:[%s336 + $0xa0] sm:%s329]
                  %379 = vst [vmem:[%s337 + $0x50] sm:%s329] %v378
                  %v380 = vld [vmem:[%s336 + $0xa8] sm:%s329]
                  %381 = vst [vmem:[%s337 + $0x54] sm:%s329] %v380
                  %v382 = vld [vmem:[%s336 + $0xb0] sm:%s329]
                  %383 = vst [vmem:[%s337 + $0x58] sm:%s329] %v382
                  %v384 = vld [vmem:[%s336 + $0xb8] sm:%s329]
                  %385 = vst [vmem:[%s337 + $0x5c] sm:%s329] %v384
                  %v386 = vld [vmem:[%s336 + $0xc0] sm:%s329]
                  %387 = vst [vmem:[%s337 + $0x60] sm:%s329] %v386
                  %v388 = vld [vmem:[%s336 + $0xc8] sm:%s329]
                  %389 = vst [vmem:[%s337 + $0x64] sm:%s329] %v388
                  %v390 = vld [vmem:[%s336 + $0xd0] sm:%s329]
                  %391 = vst [vmem:[%s337 + $0x68] sm:%s329] %v390
                  %v392 = vld [vmem:[%s336 + $0xd8] sm:%s329]
                  %393 = vst [vmem:[%s337 + $0x6c] sm:%s329] %v392
                  %v394 = vld [vmem:[%s336 + $0xe0] sm:%s329]
                  %395 = vst [vmem:[%s337 + $0x70] sm:%s329] %v394
                  %v396 = vld [vmem:[%s336 + $0xe8] sm:%s329]
                  %397 = vst [vmem:[%s337 + $0x74] sm:%s329] %v396
                  %v398 = vld [vmem:[%s336 + $0xf0] sm:%s329]
                  %399 = vst [vmem:[%s337 + $0x78] sm:%s329] %v398
                  %v400 = vld [vmem:[%s336 + $0xf8] sm:%s329]
                  %401 = vst [vmem:[%s337 + $0x7c] sm:%s329] %v400
                  %v402 = vld [vmem:[%s336 + $0x100] sm:%s329]
                  %403 = vst [vmem:[%s337 + $0x80] sm:%s329] %v402
                  %v404 = vld [vmem:[%s336 + $0x108] sm:%s329]
                  %405 = vst [vmem:[%s337 + $0x84] sm:%s329] %v404
                  %v406 = vld [vmem:[%s336 + $0x110] sm:%s329]
                  %407 = vst [vmem:[%s337 + $0x88] sm:%s329] %v406
                  %v408 = vld [vmem:[%s336 + $0x118] sm:%s329]
                  %409 = vst [vmem:[%s337 + $0x8c] sm:%s329] %v408
                  %v410 = vld [vmem:[%s336 + $0x120] sm:%s329]
                  %411 = vst [vmem:[%s337 + $0x90] sm:%s329] %v410
                  %v412 = vld [vmem:[%s336 + $0x128] sm:%s329]
                  %413 = vst [vmem:[%s337 + $0x94] sm:%s329] %v412
                  %v414 = vld [vmem:[%s336 + $0x130] sm:%s329]
                  %415 = vst [vmem:[%s337 + $0x98] sm:%s329] %v414
                  %v416 = vld [vmem:[%s336 + $0x138] sm:%s329]
                  %417 = vst [vmem:[%s337 + $0x9c] sm:%s329] %v416
                  %v418 = vld [vmem:[%s336 + $0x140] sm:%s329]
                  %419 = vst [vmem:[%s337 + $0xa0] sm:%s329] %v418
                $region63: #{tpu_custom_call.1} parent=50 // loop_footer
                  %s335 = sadd.s32 1, %s331
                $region64: #{tpu_custom_call.1} parent=50 // loop_footer_branch
                  %330 = sbr.rel target = $region60
                $region65: #{tpu_custom_call.1} parent=50 // loop_exit
                  _
              $region51: #{tpu_custom_call.1} parent=35 // pred_fallthru
                _
            $region36: #{tpu_custom_call.1} parent=31 // pred_fallthru
              _
            // Predicated region
            $region37: #{tpu_custom_call.1} parent=31 // pred_check
              _
            $region38: #{tpu_custom_call.1} parent=31 // pred_check_branch
              %225 = sbr.rel (0) target = $region40
            $region39: #{tpu_custom_call.1} parent=31 // pred_region
              %s227 = ssub.s32 16, 1
              loop: start=0, step=1, limit=1
              $region41: #{tpu_custom_call.1} parent=39 // loop_pre_header
                _
              $region42: #{tpu_custom_call.1} parent=39 // loop_header
                %s229 = sphi 0, %s233
                %p230 = scmp.ge.s32.totalorder %s229, 1
                %s234 = sphi %s219, %s219
                %s235 = sphi %s215, %s215
              $region43: #{tpu_custom_call.1} parent=39 // loop_header_branch
                %232 = sbr.rel (%p230) target = $region47
              $region44: #{tpu_custom_call.1} parent=39 // loop_body
                %v236 = vld [vmem:[%s234] sm:%s227]
                %237 = vst [vmem:[%s235] sm:%s227] %v236
                %v238 = vld [vmem:[%s234 + $0x8] sm:%s227]
                %239 = vst [vmem:[%s235 + $0x4] sm:%s227] %v238
                %v240 = vld [vmem:[%s234 + $0x10] sm:%s227]
                %241 = vst [vmem:[%s235 + $0x8] sm:%s227] %v240
                %v242 = vld [vmem:[%s234 + $0x18] sm:%s227]
                %243 = vst [vmem:[%s235 + $0xc] sm:%s227] %v242
                %v244 = vld [vmem:[%s234 + $0x20] sm:%s227]
                %245 = vst [vmem:[%s235 + $0x10] sm:%s227] %v244
                %v246 = vld [vmem:[%s234 + $0x28] sm:%s227]
                %247 = vst [vmem:[%s235 + $0x14] sm:%s227] %v246
                %v248 = vld [vmem:[%s234 + $0x30] sm:%s227]
                %249 = vst [vmem:[%s235 + $0x18] sm:%s227] %v248
                %v250 = vld [vmem:[%s234 + $0x38] sm:%s227]
                %251 = vst [vmem:[%s235 + $0x1c] sm:%s227] %v250
                %v252 = vld [vmem:[%s234 + $0x40] sm:%s227]
                %253 = vst [vmem:[%s235 + $0x20] sm:%s227] %v252
                %v254 = vld [vmem:[%s234 + $0x48] sm:%s227]
                %255 = vst [vmem:[%s235 + $0x24] sm:%s227] %v254
                %v256 = vld [vmem:[%s234 + $0x50] sm:%s227]
                %257 = vst [vmem:[%s235 + $0x28] sm:%s227] %v256
                %v258 = vld [vmem:[%s234 + $0x58] sm:%s227]
                %259 = vst [vmem:[%s235 + $0x2c] sm:%s227] %v258
                %v260 = vld [vmem:[%s234 + $0x60] sm:%s227]
                %261 = vst [vmem:[%s235 + $0x30] sm:%s227] %v260
                %v262 = vld [vmem:[%s234 + $0x68] sm:%s227]
                %263 = vst [vmem:[%s235 + $0x34] sm:%s227] %v262
                %v264 = vld [vmem:[%s234 + $0x70] sm:%s227]
                %265 = vst [vmem:[%s235 + $0x38] sm:%s227] %v264
                %v266 = vld [vmem:[%s234 + $0x78] sm:%s227]
                %267 = vst [vmem:[%s235 + $0x3c] sm:%s227] %v266
                %v268 = vld [vmem:[%s234 + $0x80] sm:%s227]
                %269 = vst [vmem:[%s235 + $0x40] sm:%s227] %v268
                %v270 = vld [vmem:[%s234 + $0x88] sm:%s227]
                %271 = vst [vmem:[%s235 + $0x44] sm:%s227] %v270
                %v272 = vld [vmem:[%s234 + $0x90] sm:%s227]
                %273 = vst [vmem:[%s235 + $0x48] sm:%s227] %v272
                %v274 = vld [vmem:[%s234 + $0x98] sm:%s227]
                %275 = vst [vmem:[%s235 + $0x4c] sm:%s227] %v274
                %v276 = vld [vmem:[%s234 + $0xa0] sm:%s227]
                %277 = vst [vmem:[%s235 + $0x50] sm:%s227] %v276
                %v278 = vld [vmem:[%s234 + $0xa8] sm:%s227]
                %279 = vst [vmem:[%s235 + $0x54] sm:%s227] %v278
                %v280 = vld [vmem:[%s234 + $0xb0] sm:%s227]
                %281 = vst [vmem:[%s235 + $0x58] sm:%s227] %v280
                %v282 = vld [vmem:[%s234 + $0xb8] sm:%s227]
                %283 = vst [vmem:[%s235 + $0x5c] sm:%s227] %v282
                %v284 = vld [vmem:[%s234 + $0xc0] sm:%s227]
                %285 = vst [vmem:[%s235 + $0x60] sm:%s227] %v284
                %v286 = vld [vmem:[%s234 + $0xc8] sm:%s227]
                %287 = vst [vmem:[%s235 + $0x64] sm:%s227] %v286
                %v288 = vld [vmem:[%s234 + $0xd0] sm:%s227]
                %289 = vst [vmem:[%s235 + $0x68] sm:%s227] %v288
                %v290 = vld [vmem:[%s234 + $0xd8] sm:%s227]
                %291 = vst [vmem:[%s235 + $0x6c] sm:%s227] %v290
                %v292 = vld [vmem:[%s234 + $0xe0] sm:%s227]
                %293 = vst [vmem:[%s235 + $0x70] sm:%s227] %v292
                %v294 = vld [vmem:[%s234 + $0xe8] sm:%s227]
                %295 = vst [vmem:[%s235 + $0x74] sm:%s227] %v294
                %v296 = vld [vmem:[%s234 + $0xf0] sm:%s227]
                %297 = vst [vmem:[%s235 + $0x78] sm:%s227] %v296
                %v298 = vld [vmem:[%s234 + $0xf8] sm:%s227]
                %299 = vst [vmem:[%s235 + $0x7c] sm:%s227] %v298
                %v300 = vld [vmem:[%s234 + $0x100] sm:%s227]
                %301 = vst [vmem:[%s235 + $0x80] sm:%s227] %v300
                %v302 = vld [vmem:[%s234 + $0x108] sm:%s227]
                %303 = vst [vmem:[%s235 + $0x84] sm:%s227] %v302
                %v304 = vld [vmem:[%s234 + $0x110] sm:%s227]
                %305 = vst [vmem:[%s235 + $0x88] sm:%s227] %v304
                %v306 = vld [vmem:[%s234 + $0x118] sm:%s227]
                %307 = vst [vmem:[%s235 + $0x8c] sm:%s227] %v306
                %v308 = vld [vmem:[%s234 + $0x120] sm:%s227]
                %309 = vst [vmem:[%s235 + $0x90] sm:%s227] %v308
                %v310 = vld [vmem:[%s234 + $0x128] sm:%s227]
                %311 = vst [vmem:[%s235 + $0x94] sm:%s227] %v310
                %v312 = vld [vmem:[%s234 + $0x130] sm:%s227]
                %313 = vst [vmem:[%s235 + $0x98] sm:%s227] %v312
                %v314 = vld [vmem:[%s234 + $0x138] sm:%s227]
                %315 = vst [vmem:[%s235 + $0x9c] sm:%s227] %v314
                %v316 = vld [vmem:[%s234 + $0x140] sm:%s227]
                %317 = vst [vmem:[%s235 + $0xa0] sm:%s227] %v316
              $region45: #{tpu_custom_call.1} parent=39 // loop_footer
                %s233 = sadd.s32 1, %s229
              $region46: #{tpu_custom_call.1} parent=39 // loop_footer_branch
                %228 = sbr.rel target = $region42
              $region47: #{tpu_custom_call.1} parent=39 // loop_exit
                _
            $region40: #{tpu_custom_call.1} parent=31 // pred_fallthru
              _
          $region32: #{tpu_custom_call.1} parent=27 // pred_fallthru
            _
          %420 = vnop
        $region28: #{tpu_custom_call.1} parent=23 // pred_fallthru
          _
        // Predicated region
        $region66: #{tpu_custom_call.1} parent=23 // pred_check
          %p421 = pneg %p122
        $region67: #{tpu_custom_call.1} parent=23 // pred_check_branch
          %423 = sbr.rel (%p421) target = $region69
        $region68: #{tpu_custom_call.1} parent=23 // pred_region
          %s424 = sand.u32 %s112, 1
          %s425 = sand.u32 %s112, 1
          %s426 = smul.addr %s425, 32
          %s427 = scalar_lea.vmem [#allocation3], %s426
          %s428 = smul.addr %s25, 8
          %s429 = sadd.s32 %s26, %s428
          %s430 = smul.addr %s429, 8
          %s431 = scalar_lea.vmem %s3, %s430
          // Predicated region
          $region70: #{tpu_custom_call.1} parent=68 // pred_check
            _
          $region71: #{tpu_custom_call.1} parent=68 // pred_check_branch
            %433 = sbr.rel (0) target = $region73
          $region72: #{tpu_custom_call.1} parent=68 // pred_region
            // Predicated region
            $region74: #{tpu_custom_call.1} parent=72 // pred_check
              _
            $region75: #{tpu_custom_call.1} parent=72 // pred_check_branch
              %435 = sbr.rel (0) target = $region77
            $region76: #{tpu_custom_call.1} parent=72 // pred_region
              // Predicated region
              $region89: #{tpu_custom_call.1} parent=76 // pred_check
                _
              $region90: #{tpu_custom_call.1} parent=76 // pred_check_branch
                %457 = sbr.rel (0) target = $region92
              $region91: #{tpu_custom_call.1} parent=76 // pred_region
                loop: start=0, step=1, limit=1
                $region93: #{tpu_custom_call.1} parent=91 // loop_pre_header
                  _
                $region94: #{tpu_custom_call.1} parent=91 // loop_header
                  %s459 = sphi 0, %s463
                  %p460 = scmp.ge.s32.totalorder %s459, 1
                  %s464 = sphi %s431, %s431
                  %s465 = sphi %s427, %s427
                $region95: #{tpu_custom_call.1} parent=91 // loop_header_branch
                  %462 = sbr.rel (%p460) target = $region99
                $region96: #{tpu_custom_call.1} parent=91 // loop_body
                  %v466 = vld [vmem:[%s464] sm:$0xff]
                  %467 = vst [vmem:[%s465] sm:$0xff] %v466
                  %v468 = vld [vmem:[%s464 + $0x10] sm:$0xff]
                  %469 = vst [vmem:[%s465 + $0x8] sm:$0xff] %v468
                  %v470 = vld [vmem:[%s464 + $0x20] sm:$0xff]
                  %471 = vst [vmem:[%s465 + $0x10] sm:$0xff] %v470
                  %v472 = vld [vmem:[%s464 + $0x30] sm:$0xff]
                  %473 = vst [vmem:[%s465 + $0x18] sm:$0xff] %v472
                $region97: #{tpu_custom_call.1} parent=91 // loop_footer
                  %s463 = sadd.s32 1, %s459
                $region98: #{tpu_custom_call.1} parent=91 // loop_footer_branch
                  %458 = sbr.rel target = $region94
                $region99: #{tpu_custom_call.1} parent=91 // loop_exit
                  _
              $region92: #{tpu_custom_call.1} parent=76 // pred_fallthru
                _
              // Predicated region
              $region100: #{tpu_custom_call.1} parent=76 // pred_check
                _
              $region101: #{tpu_custom_call.1} parent=76 // pred_check_branch
                %475 = sbr.rel target = $region103
              $region102: #{tpu_custom_call.1} parent=76 // pred_region
                _
              $region103: #{tpu_custom_call.1} parent=76 // pred_fallthru
                _
            $region77: #{tpu_custom_call.1} parent=72 // pred_fallthru
              _
            // Predicated region
            $region78: #{tpu_custom_call.1} parent=72 // pred_check
              _
            $region79: #{tpu_custom_call.1} parent=72 // pred_check_branch
              %437 = sbr.rel target = $region81
            $region80: #{tpu_custom_call.1} parent=72 // pred_region
              %s439 = ssub.s32 256, 1
              loop: start=0, step=1, limit=1
              $region82: #{tpu_custom_call.1} parent=80 // loop_pre_header
                _
              $region83: #{tpu_custom_call.1} parent=80 // loop_header
                %s441 = sphi 0, %s445
                %p442 = scmp.ge.s32.totalorder %s441, 1
                %s446 = sphi %s431, %s431
                %s447 = sphi %s427, %s427
              $region84: #{tpu_custom_call.1} parent=80 // loop_header_branch
                %444 = sbr.rel (%p442) target = $region88
              $region85: #{tpu_custom_call.1} parent=80 // loop_body
                %v448 = vld [vmem:[%s446] sm:%s439]
                %449 = vst [vmem:[%s447] sm:%s439] %v448
                %v450 = vld [vmem:[%s446 + $0x10] sm:%s439]
                %451 = vst [vmem:[%s447 + $0x8] sm:%s439] %v450
                %v452 = vld [vmem:[%s446 + $0x20] sm:%s439]
                %453 = vst [vmem:[%s447 + $0x10] sm:%s439] %v452
                %v454 = vld [vmem:[%s446 + $0x30] sm:%s439]
                %455 = vst [vmem:[%s447 + $0x18] sm:%s439] %v454
              $region86: #{tpu_custom_call.1} parent=80 // loop_footer
                %s445 = sadd.s32 1, %s441
              $region87: #{tpu_custom_call.1} parent=80 // loop_footer_branch
                %440 = sbr.rel target = $region83
              $region88: #{tpu_custom_call.1} parent=80 // loop_exit
                _
            $region81: #{tpu_custom_call.1} parent=72 // pred_fallthru
              _
          $region73: #{tpu_custom_call.1} parent=68 // pred_fallthru
            _
          %476 = vnop
        $region69: #{tpu_custom_call.1} parent=23 // pred_fallthru
          _
      $region24: #{tpu_custom_call.1} parent=5 // pred_fallthru
        _
      %p477 = scmp.le.s32.totalorder 1, %s18
      %p478 = scmp.lt.s32.totalorder %s18, 5
      %p479 = pnand %p477, %p478
      %p480 = pneg %p479
      // Predicated region
      $region104: #{tpu_custom_call.1} parent=5 // pred_check
        _
      $region105: #{tpu_custom_call.1} parent=5 // pred_check_branch
        %482 = sbr.rel (%p479) target = $region107
      $region106: #{tpu_custom_call.1} parent=5 // pred_region
        %s483 = ssub.s32 %s18, 1
        %s484 = sand.u32 %s45, 1
        %s485 = sand.u32 %s45, 1
        %s486 = smul.addr %s485, 164
        %s487 = scalar_lea.vmem [#allocation2], %s486
        // Predicated region
        $region108: #{tpu_custom_call.1} parent=106 // pred_check
          %p488 = pneg %p58
        $region109: #{tpu_custom_call.1} parent=106 // pred_check_branch
          %490 = sbr.rel (%p488) target = $region111
        $region110: #{tpu_custom_call.1} parent=106 // pred_region
          _
        $region111: #{tpu_custom_call.1} parent=106 // pred_fallthru
          _
        %s491 = sand.u32 %s115, 1
        %s492 = sand.u32 %s115, 1
        %s493 = smul.addr %s492, 32
        %s494 = scalar_lea.vmem [#allocation3], %s493
        // Predicated region
        $region112: #{tpu_custom_call.1} parent=106 // pred_check
          %p495 = pneg %p128
        $region113: #{tpu_custom_call.1} parent=106 // pred_check_branch
          %497 = sbr.rel (%p495) target = $region115
        $region114: #{tpu_custom_call.1} parent=106 // pred_region
          _
        $region115: #{tpu_custom_call.1} parent=106 // pred_fallthru
          _
        %s498 = sand.u32 %s45, 1
        %s499 = sand.u32 %s45, 1
        %s500 = smul.addr %s499, 164
        %s501 = scalar_lea.vmem [#allocation2], %s500
        %p502 = pneg %p58
        %p503 = pneg %p55
        %p504 = pneg %p79
        %p505 = pneg %p76
        %p506 = pneg %p100
        %p507 = pneg %p97
        %s508 = sand.u32 %s115, 1
        %s509 = sand.u32 %s115, 1
        %s510 = smul.addr %s509, 32
        %s511 = scalar_lea.vmem [#allocation3], %s510
        %p512 = pneg %p128
        %p513 = pneg %p125
        %p514 = pneg %p156
        %p515 = pneg %p153
        %s516 = sand.u32 %s143, 1
        %s517 = scalar_lea.sflag [#allocation5], %s516
        %s518 = sand.u32 %s143, 1
        %s519 = smul.addr %s518, 32
        %s520 = scalar_lea.vmem [#allocation4], %s519
        %p521 = pneg %p184
        %p522 = pneg %p181
        %s523 = sand.u32 %s171, 1
        %s524 = scalar_lea.sflag [#allocation7], %s523
        %s525 = sand.u32 %s171, 1
        %s526 = smul.addr %s525, 32
        %s527 = scalar_lea.vmem [#allocation6], %s526
        %v529 = vld [vmem:[%s1] sm:$0xff]
        %v530 = vld [vmem:[%s1 + $0x8] sm:$0xf]
        %v531 = vld [vmem:[%s1 + $0xc] sm:$0xff]
        %v532 = vld [vmem:[%s1 + $0x14] sm:$0xf]
        %v533 = vld [vmem:[%s1 + $0x18] sm:$0xff]
        %v534 = vld [vmem:[%s1 + $0x20] sm:$0xf]
        %v535 = vld [vmem:[%s1 + $0x24] sm:$0xff]
        %v536 = vld [vmem:[%s1 + $0x2c] sm:$0xf]
        %v537 = vld [vmem:[%s1 + $0x30] sm:$0xff]
        %v538 = vld [vmem:[%s1 + $0x38] sm:$0xf]
        %v539 = vld [vmem:[%s1 + $0x3c] sm:$0xff]
        %v540 = vld [vmem:[%s1 + $0x44] sm:$0xf]
        %v541 = vld [vmem:[%s1 + $0x48] sm:$0xff]
        %v542 = vld [vmem:[%s1 + $0x50] sm:$0xf]
        %v543 = vld [vmem:[%s1 + $0x54] sm:$0xff]
        %v544 = vld [vmem:[%s1 + $0x5c] sm:$0xf]
        %v545 = vld [vmem:[%s1 + $0x60] sm:$0xff]
        %v546 = vld [vmem:[%s1 + $0x68] sm:$0xf]
        %v547 = vld [vmem:[%s1 + $0x6c] sm:$0xff]
        %v548 = vld [vmem:[%s1 + $0x74] sm:$0xf]
        %v549 = vld [vmem:[%s1 + $0x78] sm:$0xff]
        %v550 = vld [vmem:[%s1 + $0x80] sm:$0xf]
        %v551 = vld [vmem:[%s1 + $0x84] sm:$0xff]
        %v552 = vld [vmem:[%s1 + $0x8c] sm:$0xf]
        %v553 = vld [vmem:[%s1 + $0x90] sm:$0xff]
        %v554 = vld [vmem:[%s1 + $0x98] sm:$0xf]
        %v555 = vld [vmem:[%s1 + $0x9c] sm:$0xff]
        %v556 = vld [vmem:[%s1 + $0xa4] sm:$0xf]
        %v557 = vld [vmem:[%s1 + $0xa8] sm:$0xff]
        %v558 = vld [vmem:[%s1 + $0xb0] sm:$0xf]
        %v559 = vld [vmem:[%s1 + $0xb4] sm:$0xff]
        %v560 = vld [vmem:[%s1 + $0xbc] sm:$0xf]
        %v561 = vld [vmem:[%s487] sm:$0xf]
        %v562 = vld [vmem:[%s487 + $0x4] sm:$0xf]
        %v563 = vld [vmem:[%s487 + $0x8] sm:$0xf]
        %v564 = vld [vmem:[%s487 + $0xc] sm:$0xf]
        %v565 = vld [vmem:[%s487 + $0x10] sm:$0xf]
        %v566 = vld [vmem:[%s487 + $0x14] sm:$0xf]
        %v567 = vld [vmem:[%s487 + $0x18] sm:$0xf]
        %v568 = vld [vmem:[%s487 + $0x1c] sm:$0xf]
        %v569 = vld [vmem:[%s487 + $0x20] sm:$0xf]
        %v570 = vld [vmem:[%s487 + $0x24] sm:$0xf]
        %v571 = vld [vmem:[%s487 + $0x28] sm:$0xf]
        %v572 = vld [vmem:[%s487 + $0x2c] sm:$0xf]
        %v573 = vld [vmem:[%s487 + $0x30] sm:$0xf]
        %v574 = vld [vmem:[%s487 + $0x34] sm:$0xf]
        %v575 = vld [vmem:[%s487 + $0x38] sm:$0xf]
        %v576 = vld [vmem:[%s487 + $0x3c] sm:$0xf]
        %v577 = vld [vmem:[%s487 + $0x40] sm:$0xf]
        %v578 = vld [vmem:[%s487 + $0x44] sm:$0xf]
        %v579 = vld [vmem:[%s487 + $0x48] sm:$0xf]
        %v580 = vld [vmem:[%s487 + $0x4c] sm:$0xf]
        %v581 = vld [vmem:[%s487 + $0x50] sm:$0xf]
        %v582 = vld [vmem:[%s487 + $0x54] sm:$0xf]
        %v583 = vld [vmem:[%s487 + $0x58] sm:$0xf]
        %v584 = vld [vmem:[%s487 + $0x5c] sm:$0xf]
        %v585 = vld [vmem:[%s487 + $0x60] sm:$0xf]
        %v586 = vld [vmem:[%s487 + $0x64] sm:$0xf]
        %v587 = vld [vmem:[%s487 + $0x68] sm:$0xf]
        %v588 = vld [vmem:[%s487 + $0x6c] sm:$0xf]
        %v589 = vld [vmem:[%s487 + $0x70] sm:$0xf]
        %v590 = vld [vmem:[%s487 + $0x74] sm:$0xf]
        %v591 = vld [vmem:[%s487 + $0x78] sm:$0xf]
        %v592 = vld [vmem:[%s487 + $0x7c] sm:$0xf]
        %v593 = vld [vmem:[%s487 + $0x80] sm:$0xf]
        %v594 = vld [vmem:[%s487 + $0x84] sm:$0xf]
        %v595 = vld [vmem:[%s487 + $0x88] sm:$0xf]
        %v596 = vld [vmem:[%s487 + $0x8c] sm:$0xf]
        %v597 = vld [vmem:[%s487 + $0x90] sm:$0xf]
        %v598 = vld [vmem:[%s487 + $0x94] sm:$0xf]
        %v599 = vld [vmem:[%s487 + $0x98] sm:$0xf]
        %v600 = vld [vmem:[%s487 + $0x9c] sm:$0xf]
        %v601 = vld [vmem:[%s487 + $0xa0] sm:$0x3]
        %v602 = vld [vmem:[%s2] sm:$0xff]
        %v603 = vld [vmem:[%s2 + $0x8] sm:$0xff]
        %v604 = vld [vmem:[%s2 + $0x10] sm:$0xff]
        %v605 = vld [vmem:[%s2 + $0x18] sm:$0xff]
        %v606 = vld [vmem:[%s2 + $0x20] sm:$0xff]
        %v607 = vld [vmem:[%s2 + $0x28] sm:$0xff]
        %v608 = vld [vmem:[%s2 + $0x30] sm:$0xff]
        %v609 = vld [vmem:[%s2 + $0x38] sm:$0xff]
        %v610 = vld [vmem:[%s2 + $0x40] sm:$0xff]
        %v611 = vld [vmem:[%s2 + $0x48] sm:$0xff]
        %v612 = vld [vmem:[%s2 + $0x50] sm:$0xff]
        %v613 = vld [vmem:[%s2 + $0x58] sm:$0xff]
        %v614 = vld [vmem:[%s2 + $0x60] sm:$0xff]
        %v615 = vld [vmem:[%s2 + $0x68] sm:$0xff]
        %v616 = vld [vmem:[%s2 + $0x70] sm:$0xff]
        %v617 = vld [vmem:[%s2 + $0x78] sm:$0xff]
        %619 = vset.pattern.permute.xlu0 0
        %620 = vperm.xlu0 %619, %v602
        %v621 = vpop.permute.xlu0 %620
        %624 = vset.pattern.permute.xlu0 0
        %625 = vperm.xlu0 %624, %v603
        %v626 = vpop.permute.xlu0 %625
        %629 = vset.pattern.permute.xlu0 0
        %630 = vperm.xlu0 %629, %v604
        %v631 = vpop.permute.xlu0 %630
        %634 = vset.pattern.permute.xlu0 0
        %635 = vperm.xlu0 %634, %v605
        %v636 = vpop.permute.xlu0 %635
        %639 = vset.pattern.permute.xlu0 0
        %640 = vperm.xlu0 %639, %v606
        %v641 = vpop.permute.xlu0 %640
        %644 = vset.pattern.permute.xlu0 0
        %645 = vperm.xlu0 %644, %v607
        %v646 = vpop.permute.xlu0 %645
        %649 = vset.pattern.permute.xlu0 0
        %650 = vperm.xlu0 %649, %v608
        %v651 = vpop.permute.xlu0 %650
        %654 = vset.pattern.permute.xlu0 0
        %655 = vperm.xlu0 %654, %v609
        %v656 = vpop.permute.xlu0 %655
        %659 = vset.pattern.permute.xlu0 0
        %660 = vperm.xlu0 %659, %v610
        %v661 = vpop.permute.xlu0 %660
        %664 = vset.pattern.permute.xlu0 0
        %665 = vperm.xlu0 %664, %v611
        %v666 = vpop.permute.xlu0 %665
        %669 = vset.pattern.permute.xlu0 0
        %670 = vperm.xlu0 %669, %v612
        %v671 = vpop.permute.xlu0 %670
        %674 = vset.pattern.permute.xlu0 0
        %675 = vperm.xlu0 %674, %v613
        %v676 = vpop.permute.xlu0 %675
        %679 = vset.pattern.permute.xlu0 0
        %680 = vperm.xlu0 %679, %v614
        %v681 = vpop.permute.xlu0 %680
        %684 = vset.pattern.permute.xlu0 0
        %685 = vperm.xlu0 %684, %v615
        %v686 = vpop.permute.xlu0 %685
        %689 = vset.pattern.permute.xlu0 0
        %690 = vperm.xlu0 %689, %v616
        %v691 = vpop.permute.xlu0 %690
        %694 = vset.pattern.permute.xlu0 0
        %695 = vperm.xlu0 %694, %v617
        %v696 = vpop.permute.xlu0 %695
        %v730 = vunpack.c.l.b16 %v529
        %v731 = vunpack.c.h.b16 %v529
        %v732 = vunpack.c.l.b16 %v530
        %v733 = vunpack.c.l.b16 %v531
        %v734 = vunpack.c.h.b16 %v531
        %v735 = vunpack.c.l.b16 %v532
        %v736 = vunpack.c.l.b16 %v533
        %v737 = vunpack.c.h.b16 %v533
        %v738 = vunpack.c.l.b16 %v534
        %v739 = vunpack.c.l.b16 %v535
        %v740 = vunpack.c.h.b16 %v535
        %v741 = vunpack.c.l.b16 %v536
        %v742 = vunpack.c.l.b16 %v537
        %v743 = vunpack.c.h.b16 %v537
        %v744 = vunpack.c.l.b16 %v538
        %v745 = vunpack.c.l.b16 %v539
        %v746 = vunpack.c.h.b16 %v539
        %v747 = vunpack.c.l.b16 %v540
        %v748 = vunpack.c.l.b16 %v541
        %v749 = vunpack.c.h.b16 %v541
        %v750 = vunpack.c.l.b16 %v542
        %v751 = vunpack.c.l.b16 %v543
        %v752 = vunpack.c.h.b16 %v543
        %v753 = vunpack.c.l.b16 %v544
        %v754 = vunpack.c.l.b16 %v545
        %v755 = vunpack.c.h.b16 %v545
        %v756 = vunpack.c.l.b16 %v546
        %v757 = vunpack.c.l.b16 %v547
        %v758 = vunpack.c.h.b16 %v547
        %v759 = vunpack.c.l.b16 %v548
        %v760 = vunpack.c.l.b16 %v549
        %v761 = vunpack.c.h.b16 %v549
        %v762 = vunpack.c.l.b16 %v550
        %v763 = vunpack.c.l.b16 %v551
        %v764 = vunpack.c.h.b16 %v551
        %v765 = vunpack.c.l.b16 %v552
        %v766 = vunpack.c.l.b16 %v553
        %v767 = vunpack.c.h.b16 %v553
        %v768 = vunpack.c.l.b16 %v554
        %v769 = vunpack.c.l.b16 %v555
        %v770 = vunpack.c.h.b16 %v555
        %v771 = vunpack.c.l.b16 %v556
        %v772 = vunpack.c.l.b16 %v557
        %v773 = vunpack.c.h.b16 %v557
        %v774 = vunpack.c.l.b16 %v558
        %v775 = vunpack.c.l.b16 %v559
        %v776 = vunpack.c.h.b16 %v559
        %v777 = vunpack.c.l.b16 %v560
        %v778 = vpack.c.b16 %v733, %v730
        %v779 = vpack.c.b16 %v734, %v731
        %v780 = vpack.c.b16 %v735, %v732
        %v781 = vpack.c.b16 %v739, %v736
        %v782 = vpack.c.b16 %v740, %v737
        %v783 = vpack.c.b16 %v741, %v738
        %v784 = vpack.c.b16 %v745, %v742
        %v785 = vpack.c.b16 %v746, %v743
        %v786 = vpack.c.b16 %v747, %v744
        %v787 = vpack.c.b16 %v751, %v748
        %v788 = vpack.c.b16 %v752, %v749
        %v789 = vpack.c.b16 %v753, %v750
        %v790 = vpack.c.b16 %v757, %v754
        %v791 = vpack.c.b16 %v758, %v755
        %v792 = vpack.c.b16 %v759, %v756
        %v793 = vpack.c.b16 %v763, %v760
        %v794 = vpack.c.b16 %v764, %v761
        %v795 = vpack.c.b16 %v765, %v762
        %v796 = vpack.c.b16 %v769, %v766
        %v797 = vpack.c.b16 %v770, %v767
        %v798 = vpack.c.b16 %v771, %v768
        %v799 = vpack.c.b16 %v775, %v772
        %v800 = vpack.c.b16 %v776, %v773
        %v801 = vpack.c.b16 %v777, %v774
        %v859 = vunpack.c.l.b16 %v561
        %v860 = vunpack.c.l.b16 %v562
        %v861 = vunpack.c.l.b16 %v563
        %v862 = vunpack.c.l.b16 %v564
        %v863 = vunpack.c.l.b16 %v565
        %v864 = vunpack.c.l.b16 %v566
        %v865 = vunpack.c.l.b16 %v567
        %v866 = vunpack.c.l.b16 %v568
        %v867 = vunpack.c.l.b16 %v569
        %v868 = vunpack.c.l.b16 %v570
        %v869 = vunpack.c.l.b16 %v571
        %v870 = vunpack.c.l.b16 %v572
        %v871 = vunpack.c.l.b16 %v573
        %v872 = vunpack.c.l.b16 %v574
        %v873 = vunpack.c.l.b16 %v575
        %v874 = vunpack.c.l.b16 %v576
        %v875 = vunpack.c.l.b16 %v577
        %v876 = vunpack.c.l.b16 %v578
        %v877 = vunpack.c.l.b16 %v579
        %v878 = vunpack.c.l.b16 %v580
        %v879 = vunpack.c.l.b16 %v581
        %v880 = vunpack.c.l.b16 %v582
        %v881 = vunpack.c.l.b16 %v583
        %v882 = vunpack.c.l.b16 %v584
        %v883 = vunpack.c.l.b16 %v585
        %v884 = vunpack.c.l.b16 %v586
        %v885 = vunpack.c.l.b16 %v587
        %v886 = vunpack.c.l.b16 %v588
        %v887 = vunpack.c.l.b16 %v589
        %v888 = vunpack.c.l.b16 %v590
        %v889 = vunpack.c.l.b16 %v591
        %v890 = vunpack.c.l.b16 %v592
        %v891 = vunpack.c.l.b16 %v593
        %v892 = vunpack.c.l.b16 %v594
        %v893 = vunpack.c.l.b16 %v595
        %v894 = vunpack.c.l.b16 %v596
        %v895 = vunpack.c.l.b16 %v597
        %v896 = vunpack.c.l.b16 %v598
        %v897 = vunpack.c.l.b16 %v599
        %v898 = vunpack.c.l.b16 %v600
        %v899 = vunpack.c.l.b16 %v601
        %v900 = vpack.c.b16 %v860, %v859
        %v901 = vpack.c.b16 %v862, %v861
        %v902 = vpack.c.b16 %v864, %v863
        %v903 = vpack.c.b16 %v866, %v865
        %v904 = vpack.c.b16 %v868, %v867
        %v905 = vpack.c.b16 %v870, %v869
        %v906 = vpack.c.b16 %v872, %v871
        %v907 = vpack.c.b16 %v874, %v873
        %v908 = vpack.c.b16 %v876, %v875
        %v909 = vpack.c.b16 %v878, %v877
        %v910 = vpack.c.b16 %v880, %v879
        %v911 = vpack.c.b16 %v882, %v881
        %v912 = vpack.c.b16 %v884, %v883
        %v913 = vpack.c.b16 %v886, %v885
        %v914 = vpack.c.b16 %v888, %v887
        %v915 = vpack.c.b16 %v890, %v889
        %v916 = vpack.c.b16 %v892, %v891
        %v917 = vpack.c.b16 %v894, %v893
        %v918 = vpack.c.b16 %v896, %v895
        %v919 = vpack.c.b16 %v898, %v897
        %v920 = vpack.c.b16 %v899, %v899
        %vm941 = vcmask 556032
        %v943 = vsel %vm941, %v780, 0
        %v946 = vsel %vm941, %v783, 0
        %v949 = vsel %vm941, %v786, 0
        %v952 = vsel %vm941, %v789, 0
        %v955 = vsel %vm941, %v792, 0
        %v958 = vsel %vm941, %v795, 0
        %v961 = vsel %vm941, %v798, 0
        %v964 = vsel %vm941, %v801, 0
        %vm966 = vcmask 1041408
        %v968 = vsel %vm966, %v920, 0
        %970 = vmatpush.bf16.msra.mxu0 %v907
        %971 = vmatpush.bf16.msra.mxu0 %v906
        %972 = vmatpush.bf16.msra.mxu0 %v905
        %973 = vmatpush.bf16.msra.mxu0 %v904
        %974 = vmatpush.bf16.msra.mxu0 %v903
        %975 = vmatpush.bf16.msra.mxu0 %v902
        %976 = vmatpush.bf16.msra.mxu0 %v901
        %977 = vmatpush.bf16.msra.mxu0 %v900
        %978 = vmatmul.bf16.gmra.mxu0 %v778
        %v979 = vpop.f32.mrf.mxu0
        %v980 = vadd.f32 %v621, %v979
        %v981 = vpop.f32.mrf.mxu0
        %v982 = vadd.f32 %v626, %v981
        %983 = vmatmul.bf16.gmra.mxu0 %v781
        %v984 = vpop.f32.mrf.mxu0
        %v985 = vadd.f32 %v631, %v984
        %v986 = vpop.f32.mrf.mxu0
        %v987 = vadd.f32 %v636, %v986
        %988 = vmatmul.bf16.gmra.mxu0 %v784
        %v989 = vpop.f32.mrf.mxu0
        %v990 = vadd.f32 %v641, %v989
        %v991 = vpop.f32.mrf.mxu0
        %v992 = vadd.f32 %v646, %v991
        %993 = vmatmul.bf16.gmra.mxu0 %v787
        %v994 = vpop.f32.mrf.mxu0
        %v995 = vadd.f32 %v651, %v994
        %v996 = vpop.f32.mrf.mxu0
        %v997 = vadd.f32 %v656, %v996
        %998 = vmatmul.bf16.gmra.mxu0 %v790
        %v999 = vpop.f32.mrf.mxu0
        %v1000 = vadd.f32 %v661, %v999
        %v1001 = vpop.f32.mrf.mxu0
        %v1002 = vadd.f32 %v666, %v1001
        %1003 = vmatmul.bf16.gmra.mxu0 %v793
        %v1004 = vpop.f32.mrf.mxu0
        %v1005 = vadd.f32 %v671, %v1004
        %v1006 = vpop.f32.mrf.mxu0
        %v1007 = vadd.f32 %v676, %v1006
        %1008 = vmatmul.bf16.gmra.mxu0 %v796
        %v1009 = vpop.f32.mrf.mxu0
        %v1010 = vadd.f32 %v681, %v1009
        %v1011 = vpop.f32.mrf.mxu0
        %v1012 = vadd.f32 %v686, %v1011
        %1013 = vmatmul.bf16.gmra.mxu0 %v799
        %v1014 = vpop.f32.mrf.mxu0
        %v1015 = vadd.f32 %v691, %v1014
        %v1016 = vpop.f32.mrf.mxu0
        %v1017 = vadd.f32 %v696, %v1016
        %1018 = vdwg.mxu0
        %1019 = vmatpush.bf16.msra.mxu0 %v915
        %1020 = vmatpush.bf16.msra.mxu0 %v914
        %1021 = vmatpush.bf16.msra.mxu0 %v913
        %1022 = vmatpush.bf16.msra.mxu0 %v912
        %1023 = vmatpush.bf16.msra.mxu0 %v911
        %1024 = vmatpush.bf16.msra.mxu0 %v910
        %1025 = vmatpush.bf16.msra.mxu0 %v909
        %1026 = vmatpush.bf16.msra.mxu0 %v908
        %1027 = vmatmul.bf16.gmra.mxu0 %v779
        %v1028 = vpop.f32.mrf.mxu0
        %v1029 = vadd.f32 %v980, %v1028
        %v1030 = vpop.f32.mrf.mxu0
        %v1031 = vadd.f32 %v982, %v1030
        %1032 = vmatmul.bf16.gmra.mxu0 %v782
        %v1033 = vpop.f32.mrf.mxu0
        %v1034 = vadd.f32 %v985, %v1033
        %v1035 = vpop.f32.mrf.mxu0
        %v1036 = vadd.f32 %v987, %v1035
        %1037 = vmatmul.bf16.gmra.mxu0 %v785
        %v1038 = vpop.f32.mrf.mxu0
        %v1039 = vadd.f32 %v990, %v1038
        %v1040 = vpop.f32.mrf.mxu0
        %v1041 = vadd.f32 %v992, %v1040
        %1042 = vmatmul.bf16.gmra.mxu0 %v788
        %v1043 = vpop.f32.mrf.mxu0
        %v1044 = vadd.f32 %v995, %v1043
        %v1045 = vpop.f32.mrf.mxu0
        %v1046 = vadd.f32 %v997, %v1045
        %1047 = vmatmul.bf16.gmra.mxu0 %v791
        %v1048 = vpop.f32.mrf.mxu0
        %v1049 = vadd.f32 %v1000, %v1048
        %v1050 = vpop.f32.mrf.mxu0
        %v1051 = vadd.f32 %v1002, %v1050
        %1052 = vmatmul.bf16.gmra.mxu0 %v794
        %v1053 = vpop.f32.mrf.mxu0
        %v1054 = vadd.f32 %v1005, %v1053
        %v1055 = vpop.f32.mrf.mxu0
        %v1056 = vadd.f32 %v1007, %v1055
        %1057 = vmatmul.bf16.gmra.mxu0 %v797
        %v1058 = vpop.f32.mrf.mxu0
        %v1059 = vadd.f32 %v1010, %v1058
        %v1060 = vpop.f32.mrf.mxu0
        %v1061 = vadd.f32 %v1012, %v1060
        %1062 = vmatmul.bf16.gmra.mxu0 %v800
        %v1063 = vpop.f32.mrf.mxu0
        %v1064 = vadd.f32 %v1015, %v1063
        %v1065 = vpop.f32.mrf.mxu0
        %v1066 = vadd.f32 %v1017, %v1065
        %1067 = vdwg.mxu0
        %1068 = vmatpush.bf16.msra.mxu0 0
        %1069 = vmatpush.bf16.msra.mxu0 0
        %1070 = vmatpush.bf16.msra.mxu0 0
        %1071 = vmatpush.bf16.msra.mxu0 %v968
        %1072 = vmatpush.bf16.msra.mxu0 %v919
        %1073 = vmatpush.bf16.msra.mxu0 %v918
        %1074 = vmatpush.bf16.msra.mxu0 %v917
        %1075 = vmatpush.bf16.msra.mxu0 %v916
        %1076 = vmatmul.bf16.gmra.mxu0 %v943
        %v1077 = vpop.f32.mrf.mxu0
        %v1078 = vadd.f32 %v1029, %v1077
        %v1079 = vpop.f32.mrf.mxu0
        %v1080 = vadd.f32 %v1031, %v1079
        %1081 = vmatmul.bf16.gmra.mxu0 %v946
        %v1082 = vpop.f32.mrf.mxu0
        %v1083 = vadd.f32 %v1034, %v1082
        %v1084 = vpop.f32.mrf.mxu0
        %v1085 = vadd.f32 %v1036, %v1084
        %1086 = vmatmul.bf16.gmra.mxu0 %v949
        %v1087 = vpop.f32.mrf.mxu0
        %v1088 = vadd.f32 %v1039, %v1087
        %v1089 = vpop.f32.mrf.mxu0
        %v1090 = vadd.f32 %v1041, %v1089
        %1091 = vmatmul.bf16.gmra.mxu0 %v952
        %v1092 = vpop.f32.mrf.mxu0
        %v1093 = vadd.f32 %v1044, %v1092
        %v1094 = vpop.f32.mrf.mxu0
        %v1095 = vadd.f32 %v1046, %v1094
        %1096 = vmatmul.bf16.gmra.mxu0 %v955
        %v1097 = vpop.f32.mrf.mxu0
        %v1098 = vadd.f32 %v1049, %v1097
        %v1099 = vpop.f32.mrf.mxu0
        %v1100 = vadd.f32 %v1051, %v1099
        %1101 = vmatmul.bf16.gmra.mxu0 %v958
        %v1102 = vpop.f32.mrf.mxu0
        %v1103 = vadd.f32 %v1054, %v1102
        %v1104 = vpop.f32.mrf.mxu0
        %v1105 = vadd.f32 %v1056, %v1104
        %1106 = vmatmul.bf16.gmra.mxu0 %v961
        %v1107 = vpop.f32.mrf.mxu0
        %v1108 = vadd.f32 %v1059, %v1107
        %v1109 = vpop.f32.mrf.mxu0
        %v1110 = vadd.f32 %v1061, %v1109
        %1111 = vmatmul.bf16.gmra.mxu0 %v964
        %v1112 = vpop.f32.mrf.mxu0
        %v1113 = vadd.f32 %v1064, %v1112
        %v1114 = vpop.f32.mrf.mxu0
        %v1115 = vadd.f32 %v1066, %v1114
        %1116 = vdwg.mxu0
        %v1117 = vxor.u32 %v1078, 2147483648
        %v1118 = vxor.u32 %v1080, 2147483648
        %v1119 = vxor.u32 %v1083, 2147483648
        %v1120 = vxor.u32 %v1085, 2147483648
        %v1121 = vmul.f32 %v1117, 1.442695
        %v1122 = vpow.pop %v1121
        %v1123 = vmul.f32 %v1118, 1.442695
        %v1124 = vpow.pop %v1123
        %v1125 = vmul.f32 %v1119, 1.442695
        %v1126 = vpow.pop %v1125
        %v1127 = vmul.f32 %v1120, 1.442695
        %v1128 = vpow.pop %v1127
        %v1129 = vadd.f32 %v1122, 1.0
        %v1130 = vadd.f32 %v1124, 1.0
        %v1131 = vadd.f32 %v1126, 1.0
        %v1132 = vadd.f32 %v1128, 1.0
        %v1133 = vrcp.pop %v1129
        %v1134 = vmul.f32 %v1129, %v1133
        %v1135 = vsub.f32 1.0, %v1134
        %v1136 = vmul.f32 %v1133, %v1135
        %v1137 = vadd.f32 %v1133, %v1136
        %vm1138 = vweird.f32 %v1129
        %vm1139 = vweird.f32 %v1133
        %vm1140 = vmor %vm1138, %vm1139
        %v1141 = vsel %vm1140, %v1133, %v1137
        %v1142 = vand.u32 2147483647, %v1129
        %vm1143 = vcmp.eq.f32.partialorder %v1142, 8.507059e+37
        %v1144 = vand.u32 %v1129, 2147483648
        %v1145 = vor.u32 1.1754944e-38, %v1144
        %v1146 = vsel %vm1143, %v1145, %v1141
        %v1147 = vmul.f32 1.0, %v1146
        %v1148 = vrcp.pop %v1130
        %v1149 = vmul.f32 %v1130, %v1148
        %v1150 = vsub.f32 1.0, %v1149
        %v1151 = vmul.f32 %v1148, %v1150
        %v1152 = vadd.f32 %v1148, %v1151
        %vm1153 = vweird.f32 %v1130
        %vm1154 = vweird.f32 %v1148
        %vm1155 = vmor %vm1153, %vm1154
        %v1156 = vsel %vm1155, %v1148, %v1152
        %v1157 = vand.u32 2147483647, %v1130
        %vm1158 = vcmp.eq.f32.partialorder %v1157, 8.507059e+37
        %v1159 = vand.u32 %v1130, 2147483648
        %v1160 = vor.u32 1.1754944e-38, %v1159
        %v1161 = vsel %vm1158, %v1160, %v1156
        %v1162 = vmul.f32 1.0, %v1161
        %v1163 = vrcp.pop %v1131
        %v1164 = vmul.f32 %v1131, %v1163
        %v1165 = vsub.f32 1.0, %v1164
        %v1166 = vmul.f32 %v1163, %v1165
        %v1167 = vadd.f32 %v1163, %v1166
        %vm1168 = vweird.f32 %v1131
        %vm1169 = vweird.f32 %v1163
        %vm1170 = vmor %vm1168, %vm1169
        %v1171 = vsel %vm1170, %v1163, %v1167
        %v1172 = vand.u32 2147483647, %v1131
        %vm1173 = vcmp.eq.f32.partialorder %v1172, 8.507059e+37
        %v1174 = vand.u32 %v1131, 2147483648
        %v1175 = vor.u32 1.1754944e-38, %v1174
        %v1176 = vsel %vm1173, %v1175, %v1171
        %v1177 = vmul.f32 1.0, %v1176
        %v1178 = vrcp.pop %v1132
        %v1179 = vmul.f32 %v1132, %v1178
        %v1180 = vsub.f32 1.0, %v1179
        %v1181 = vmul.f32 %v1178, %v1180
        %v1182 = vadd.f32 %v1178, %v1181
        %vm1183 = vweird.f32 %v1132
        %vm1184 = vweird.f32 %v1178
        %vm1185 = vmor %vm1183, %vm1184
        %v1186 = vsel %vm1185, %v1178, %v1182
        %v1187 = vand.u32 2147483647, %v1132
        %vm1188 = vcmp.eq.f32.partialorder %v1187, 8.507059e+37
        %v1189 = vand.u32 %v1132, 2147483648
        %v1190 = vor.u32 1.1754944e-38, %v1189
        %v1191 = vsel %vm1188, %v1190, %v1186
        %v1192 = vmul.f32 1.0, %v1191
        %v1193 = vxor.u32 %v1088, 2147483648
        %v1194 = vxor.u32 %v1090, 2147483648
        %v1195 = vxor.u32 %v1093, 2147483648
        %v1196 = vxor.u32 %v1095, 2147483648
        %v1197 = vmul.f32 %v1193, 1.442695
        %v1198 = vpow.pop %v1197
        %v1199 = vmul.f32 %v1194, 1.442695
        %v1200 = vpow.pop %v1199
        %v1201 = vmul.f32 %v1195, 1.442695
        %v1202 = vpow.pop %v1201
        %v1203 = vmul.f32 %v1196, 1.442695
        %v1204 = vpow.pop %v1203
        %v1205 = vadd.f32 %v1198, 1.0
        %v1206 = vadd.f32 %v1200, 1.0
        %v1207 = vadd.f32 %v1202, 1.0
        %v1208 = vadd.f32 %v1204, 1.0
        %v1209 = vrcp.pop %v1205
        %v1210 = vmul.f32 %v1205, %v1209
        %v1211 = vsub.f32 1.0, %v1210
        %v1212 = vmul.f32 %v1209, %v1211
        %v1213 = vadd.f32 %v1209, %v1212
        %vm1214 = vweird.f32 %v1205
        %vm1215 = vweird.f32 %v1209
        %vm1216 = vmor %vm1214, %vm1215
        %v1217 = vsel %vm1216, %v1209, %v1213
        %v1218 = vand.u32 2147483647, %v1205
        %vm1219 = vcmp.eq.f32.partialorder %v1218, 8.507059e+37
        %v1220 = vand.u32 %v1205, 2147483648
        %v1221 = vor.u32 1.1754944e-38, %v1220
        %v1222 = vsel %vm1219, %v1221, %v1217
        %v1223 = vmul.f32 1.0, %v1222
        %v1224 = vrcp.pop %v1206
        %v1225 = vmul.f32 %v1206, %v1224
        %v1226 = vsub.f32 1.0, %v1225
        %v1227 = vmul.f32 %v1224, %v1226
        %v1228 = vadd.f32 %v1224, %v1227
        %vm1229 = vweird.f32 %v1206
        %vm1230 = vweird.f32 %v1224
        %vm1231 = vmor %vm1229, %vm1230
        %v1232 = vsel %vm1231, %v1224, %v1228
        %v1233 = vand.u32 2147483647, %v1206
        %vm1234 = vcmp.eq.f32.partialorder %v1233, 8.507059e+37
        %v1235 = vand.u32 %v1206, 2147483648
        %v1236 = vor.u32 1.1754944e-38, %v1235
        %v1237 = vsel %vm1234, %v1236, %v1232
        %v1238 = vmul.f32 1.0, %v1237
        %v1239 = vrcp.pop %v1207
        %v1240 = vmul.f32 %v1207, %v1239
        %v1241 = vsub.f32 1.0, %v1240
        %v1242 = vmul.f32 %v1239, %v1241
        %v1243 = vadd.f32 %v1239, %v1242
        %vm1244 = vweird.f32 %v1207
        %vm1245 = vweird.f32 %v1239
        %vm1246 = vmor %vm1244, %vm1245
        %v1247 = vsel %vm1246, %v1239, %v1243
        %v1248 = vand.u32 2147483647, %v1207
        %vm1249 = vcmp.eq.f32.partialorder %v1248, 8.507059e+37
        %v1250 = vand.u32 %v1207, 2147483648
        %v1251 = vor.u32 1.1754944e-38, %v1250
        %v1252 = vsel %vm1249, %v1251, %v1247
        %v1253 = vmul.f32 1.0, %v1252
        %v1254 = vrcp.pop %v1208
        %v1255 = vmul.f32 %v1208, %v1254
        %v1256 = vsub.f32 1.0, %v1255
        %v1257 = vmul.f32 %v1254, %v1256
        %v1258 = vadd.f32 %v1254, %v1257
        %vm1259 = vweird.f32 %v1208
        %vm1260 = vweird.f32 %v1254
        %vm1261 = vmor %vm1259, %vm1260
        %v1262 = vsel %vm1261, %v1254, %v1258
        %v1263 = vand.u32 2147483647, %v1208
        %vm1264 = vcmp.eq.f32.partialorder %v1263, 8.507059e+37
        %v1265 = vand.u32 %v1208, 2147483648
        %v1266 = vor.u32 1.1754944e-38, %v1265
        %v1267 = vsel %vm1264, %v1266, %v1262
        %v1268 = vmul.f32 1.0, %v1267
        %v1269 = vxor.u32 %v1098, 2147483648
        %v1270 = vxor.u32 %v1100, 2147483648
        %v1271 = vxor.u32 %v1103, 2147483648
        %v1272 = vxor.u32 %v1105, 2147483648
        %v1273 = vmul.f32 %v1269, 1.442695
        %v1274 = vpow.pop %v1273
        %v1275 = vmul.f32 %v1270, 1.442695
        %v1276 = vpow.pop %v1275
        %v1277 = vmul.f32 %v1271, 1.442695
        %v1278 = vpow.pop %v1277
        %v1279 = vmul.f32 %v1272, 1.442695
        %v1280 = vpow.pop %v1279
        %v1281 = vadd.f32 %v1274, 1.0
        %v1282 = vadd.f32 %v1276, 1.0
        %v1283 = vadd.f32 %v1278, 1.0
        %v1284 = vadd.f32 %v1280, 1.0
        %v1285 = vrcp.pop %v1281
        %v1286 = vmul.f32 %v1281, %v1285
        %v1287 = vsub.f32 1.0, %v1286
        %v1288 = vmul.f32 %v1285, %v1287
        %v1289 = vadd.f32 %v1285, %v1288
        %vm1290 = vweird.f32 %v1281
        %vm1291 = vweird.f32 %v1285
        %vm1292 = vmor %vm1290, %vm1291
        %v1293 = vsel %vm1292, %v1285, %v1289
        %v1294 = vand.u32 2147483647, %v1281
        %vm1295 = vcmp.eq.f32.partialorder %v1294, 8.507059e+37
        %v1296 = vand.u32 %v1281, 2147483648
        %v1297 = vor.u32 1.1754944e-38, %v1296
        %v1298 = vsel %vm1295, %v1297, %v1293
        %v1299 = vmul.f32 1.0, %v1298
        %v1300 = vrcp.pop %v1282
        %v1301 = vmul.f32 %v1282, %v1300
        %v1302 = vsub.f32 1.0, %v1301
        %v1303 = vmul.f32 %v1300, %v1302
        %v1304 = vadd.f32 %v1300, %v1303
        %vm1305 = vweird.f32 %v1282
        %vm1306 = vweird.f32 %v1300
        %vm1307 = vmor %vm1305, %vm1306
        %v1308 = vsel %vm1307, %v1300, %v1304
        %v1309 = vand.u32 2147483647, %v1282
        %vm1310 = vcmp.eq.f32.partialorder %v1309, 8.507059e+37
        %v1311 = vand.u32 %v1282, 2147483648
        %v1312 = vor.u32 1.1754944e-38, %v1311
        %v1313 = vsel %vm1310, %v1312, %v1308
        %v1314 = vmul.f32 1.0, %v1313
        %v1315 = vrcp.pop %v1283
        %v1316 = vmul.f32 %v1283, %v1315
        %v1317 = vsub.f32 1.0, %v1316
        %v1318 = vmul.f32 %v1315, %v1317
        %v1319 = vadd.f32 %v1315, %v1318
        %vm1320 = vweird.f32 %v1283
        %vm1321 = vweird.f32 %v1315
        %vm1322 = vmor %vm1320, %vm1321
        %v1323 = vsel %vm1322, %v1315, %v1319
        %v1324 = vand.u32 2147483647, %v1283
        %vm1325 = vcmp.eq.f32.partialorder %v1324, 8.507059e+37
        %v1326 = vand.u32 %v1283, 2147483648
        %v1327 = vor.u32 1.1754944e-38, %v1326
        %v1328 = vsel %vm1325, %v1327, %v1323
        %v1329 = vmul.f32 1.0, %v1328
        %v1330 = vrcp.pop %v1284
        %v1331 = vmul.f32 %v1284, %v1330
        %v1332 = vsub.f32 1.0, %v1331
        %v1333 = vmul.f32 %v1330, %v1332
        %v1334 = vadd.f32 %v1330, %v1333
        %vm1335 = vweird.f32 %v1284
        %vm1336 = vweird.f32 %v1330
        %vm1337 = vmor %vm1335, %vm1336
        %v1338 = vsel %vm1337, %v1330, %v1334
        %v1339 = vand.u32 2147483647, %v1284
        %vm1340 = vcmp.eq.f32.partialorder %v1339, 8.507059e+37
        %v1341 = vand.u32 %v1284, 2147483648
        %v1342 = vor.u32 1.1754944e-38, %v1341
        %v1343 = vsel %vm1340, %v1342, %v1338
        %v1344 = vmul.f32 1.0, %v1343
        %v1345 = vtanh.pop %v1108
        %v1346 = vtanh.pop %v1110
        %v1347 = vtanh.pop %v1113
        %v1348 = vtanh.pop %v1115
        %v1349 = vld [vmem:[%s494] sm:$0xff]
        %v1350 = vld [vmem:[%s494 + $0x8] sm:$0xff]
        %v1351 = vld [vmem:[%s494 + $0x10] sm:$0xff]
        %v1352 = vld [vmem:[%s494 + $0x18] sm:$0xff]
        %v1353 = vmul.f32 %v1223, %v1349
        %v1354 = vmul.f32 %v1238, %v1350
        %v1355 = vmul.f32 %v1253, %v1351
        %v1356 = vmul.f32 %v1268, %v1352
        %v1357 = vmul.f32 %v1147, %v1345
        %v1358 = vmul.f32 %v1162, %v1346
        %v1359 = vmul.f32 %v1177, %v1347
        %v1360 = vmul.f32 %v1192, %v1348
        %v1361 = vadd.f32 %v1353, %v1357
        %v1362 = vadd.f32 %v1354, %v1358
        %v1363 = vadd.f32 %v1355, %v1359
        %v1364 = vadd.f32 %v1356, %v1360
        %v1365 = vtanh.pop %v1361
        %v1366 = vtanh.pop %v1362
        %v1367 = vtanh.pop %v1363
        %v1368 = vtanh.pop %v1364
        %v1369 = vmul.f32 %v1299, %v1365
        %v1370 = vmul.f32 %v1314, %v1366
        %v1371 = vmul.f32 %v1329, %v1367
        %v1372 = vmul.f32 %v1344, %v1368
        %1373 = vst [vmem:[%s520] sm:$0xff] %v1369
        %1374 = vst [vmem:[%s520 + $0x8] sm:$0xff] %v1370
        %1375 = vst [vmem:[%s520 + $0x10] sm:$0xff] %v1371
        %1376 = vst [vmem:[%s520 + $0x18] sm:$0xff] %v1372
        %1377 = vst [vmem:[%s527] sm:$0xff] %v1361
        %1378 = vst [vmem:[%s527 + $0x8] sm:$0xff] %v1362
        %1379 = vst [vmem:[%s527 + $0x10] sm:$0xff] %v1363
        %1380 = vst [vmem:[%s527 + $0x18] sm:$0xff] %v1364
        %s1381 = sand.u32 %s143, 1
        %s1382 = scalar_lea.sflag [#allocation5], %s1381
        %s1383 = sand.u32 %s143, 1
        %s1384 = smul.addr %s1383, 32
        %s1385 = scalar_lea.vmem [#allocation4], %s1384
        %s1386 = sand.u32 %s171, 1
        %s1387 = scalar_lea.sflag [#allocation7], %s1386
        %s1388 = sand.u32 %s171, 1
        %s1389 = smul.addr %s1388, 32
        %s1390 = scalar_lea.vmem [#allocation6], %s1389
        // Predicated region
        $region116: #{tpu_custom_call.1} parent=106 // pred_check
          %p1391 = pneg %p153
        $region117: #{tpu_custom_call.1} parent=106 // pred_check_branch
          %1393 = sbr.rel (%p1391) target = $region119
        $region118: #{tpu_custom_call.1} parent=106 // pred_region
          %1395 = vsyncadd %s1382, 0
          %s1396 = smul.addr %s27, 8
          %s1397 = sadd.s32 %s28, %s1396
          %s1398 = smul.addr %s1397, 8
          %s1399 = scalar_lea.hbm %s4, %s1398
          %s1400 = sshll.u32 %s1385, 4
          %s1401 = int_to_ptr.vmem [resolvable:$true] %s1400
          %s1402 = sshll.u32 %s1399, 4
          %s1403 = int_to_ptr.hbm [resolvable:$true] %s1402
          %1408 = dma.vmem_to_hbm [thread:$0]  %s1401, 512, %s1403, %s1382, 128, 256, 8
        $region119: #{tpu_custom_call.1} parent=106 // pred_fallthru
          _
        // Predicated region
        $region120: #{tpu_custom_call.1} parent=106 // pred_check
          %p1409 = pneg %p181
        $region121: #{tpu_custom_call.1} parent=106 // pred_check_branch
          %1411 = sbr.rel (%p1409) target = $region123
        $region122: #{tpu_custom_call.1} parent=106 // pred_region
          %1413 = vsyncadd %s1387, 0
          %s1414 = smul.addr %s27, 8
          %s1415 = sadd.s32 %s28, %s1414
          %s1416 = smul.addr %s1415, 8
          %s1417 = scalar_lea.hbm %s5, %s1416
          %s1418 = sshll.u32 %s1390, 4
          %s1419 = int_to_ptr.vmem [resolvable:$true] %s1418
          %s1420 = sshll.u32 %s1417, 4
          %s1421 = int_to_ptr.hbm [resolvable:$true] %s1420
          %1426 = dma.vmem_to_hbm [thread:$0]  %s1419, 512, %s1421, %s1387, 128, 256, 8
        $region123: #{tpu_custom_call.1} parent=106 // pred_fallthru
          _
      $region107: #{tpu_custom_call.1} parent=5 // pred_fallthru
        _
      %p1427 = scmp.le.s32.totalorder 2, %s18
      // Predicated region
      $region124: #{tpu_custom_call.1} parent=5 // pred_check
        %p1428 = pneg %p1427
      $region125: #{tpu_custom_call.1} parent=5 // pred_check_branch
        %1430 = sbr.rel (%p1428) target = $region127
      $region126: #{tpu_custom_call.1} parent=5 // pred_region
        %s1431 = ssub.s32 %s18, 2
        // Predicated region
        $region128: #{tpu_custom_call.1} parent=126 // pred_check
          %p1432 = pneg %p159
        $region129: #{tpu_custom_call.1} parent=126 // pred_check_branch
          %1434 = sbr.rel (%p1432) target = $region131
        $region130: #{tpu_custom_call.1} parent=126 // pred_region
          %s1435 = sand.u32 %s144, 1
          %s1436 = scalar_lea.sflag [#allocation5], %s1435
          %s1437 = sand.u32 %s144, 1
          %s1438 = smul.addr %s1437, 32
          %s1439 = scalar_lea.vmem [#allocation4], %s1438
          %1441 = dma.done %s1436, 512
        $region131: #{tpu_custom_call.1} parent=126 // pred_fallthru
          _
        // Predicated region
        $region132: #{tpu_custom_call.1} parent=126 // pred_check
          %p1442 = pneg %p187
        $region133: #{tpu_custom_call.1} parent=126 // pred_check_branch
          %1444 = sbr.rel (%p1442) target = $region135
        $region134: #{tpu_custom_call.1} parent=126 // pred_region
          %s1445 = sand.u32 %s172, 1
          %s1446 = scalar_lea.sflag [#allocation7], %s1445
          %s1447 = sand.u32 %s172, 1
          %s1448 = smul.addr %s1447, 32
          %s1449 = scalar_lea.vmem [#allocation6], %s1448
          %1451 = dma.done %s1446, 512
        $region135: #{tpu_custom_call.1} parent=126 // pred_fallthru
          _
      $region127: #{tpu_custom_call.1} parent=5 // pred_fallthru
        _
    $region6: #{tpu_custom_call.1} parent=1 // loop_footer
      %s22 = sadd.s32 1, %s18
    $region7: #{tpu_custom_call.1} parent=1 // loop_footer_branch
      %17 = sbr.rel target = $region3
    $region8: #{tpu_custom_call.1} parent=1 // loop_exit
      _
    %1452 = vsyncpa [#allocation5], 1
    %s1453 = scalar_lea.sflag [#allocation5], 1
    %1454 = vsyncpa %s1453, 1
    %1455 = vsyncpa [#allocation7], 1
    %s1456 = scalar_lea.sflag [#allocation7], 1
    %1457 = vsyncpa %s1456, 1

</llo_original>
